<compile_context>
chip_gen: v7x
topology: tpu7x:2x2x1
jax: 0.10.0
libtpu: 0.0.40
codegen_flags: <defaults>
</compile_context>

<pallas_src>
import functools

import jax
import jax.numpy as jnp
from jax.experimental import pallas as pl
from jax.experimental.pallas import tpu as pltpu

# ----------------------------- model config (small, synthetic) ----------------------
BATCH = 2
SEQ = 8
HIDDEN = 32
NUM_HEADS = 4
HEAD_DIM = HIDDEN // NUM_HEADS
FFN_DIM = 64
NUM_LAYERS = 2
VOCAB = 50
MAX_POS = 16
N_EMO = 13          # matches BertEDARC default n_emo=13
LN_EPS = 1e-12      # BERT layernorm eps

ROWS_PAD = 8        # sublane-padded row count for the output slab (>= BATCH + 1)
LANE = 128          # lane-dense output width (>= N_EMO)
QKV_PAD = 128       # fused QKV output lanes: [Q(0:32) | pad(32:64) | K(64:96) | V(96:128)]

NEG_BIG = -1e30     # keep in f32 (overflows bf16)


def _vmem():
    return pl.BlockSpec(memory_space=pltpu.MemorySpace.VMEM)


# ----------------------------- in-kernel helpers -------------------------------------
def _layernorm(h, g, b):
    # one-pass statistics: E[x], E[x^2] -> var = E[x^2] - mu^2 (two independent reductions)
    mu = jnp.mean(h, axis=-1, keepdims=True)
    m2 = jnp.mean(h * h, axis=-1, keepdims=True)
    var = m2 - mu * mu
    return (h - mu) * jax.lax.rsqrt(var + LN_EPS) * g + b


def _gelu(x):
    # TODO(synk): HuggingFace BERT uses exact erf GELU; tanh approximation kept (EUP-friendly).
    c = 0.7978845608028654  # sqrt(2/pi)
    return 0.5 * x * (1.0 + jnp.tanh(c * (x + 0.044715 * x * x * x)))


def _bdot(a_f32, w_bf16):
    # MXU is bf16-native on all generations: cast activation, accumulate in f32.
    return jnp.dot(a_f32.astype(jnp.bfloat16), w_bf16, preferred_element_type=jnp.float32)


# ----------------------------- fused Pallas kernel -----------------------------------
def bert_edarc_fused_kernel(
        # inputs
        ids_ref, labels_ref,
        tok_emb_ref, pos_add_ref, emb_g_ref, emb_b_ref,
        attn_bias_ref, mq_ref, mv_ref, rep_ref, rep_t_ref, cls_sel_ref,
        wqkv_ref, bqkv_ref, wo_ref, bo_ref, ln1_g_ref, ln1_b_ref,
        w1_ref, b1_ref, w2_ref, b2_ref, ln2_g_ref, ln2_b_ref,
        emo_w_ref, emo_b_ref,
        # output
        out_ref,
        *, batch, seq, num_layers, n_emo, rows_pad, lane):
    bf16 = jnp.bfloat16
    n_tok = batch * seq

    # ---- embeddings: token one-hot matmul (runtime ids) + trace-time-folded positions ----
    vocab = tok_emb_ref.shape[0]
    tok_oh = (jax.lax.broadcasted_iota(jnp.int32, (n_tok, vocab), 1)
              == ids_ref[...]).astype(bf16)                              # (N, VOCAB)
    x = jnp.dot(tok_oh, tok_emb_ref[...],
                preferred_element_type=jnp.float32) + pos_add_ref[...]   # (N, H) f32
    x = _layernorm(x, emb_g_ref[...], emb_b_ref[...])

    # hoisted loop invariants (trace-time constants)
    attn_bias = attn_bias_ref[...]     # (NH*N, N)  f32: block-diag batch mask, stacked per head
    mq_stack = mq_ref[...]             # (NH*N, 128) f32: head lane mask over the Q block
    mv_stack = mv_ref[...]             # (NH*N, 128) f32: head lane mask over the V block
    rep = rep_ref[...]                 # (NH*N, N)  bf16: sublane replication matrix
    rep_t = rep_t_ref[...]             # (N, NH*N)  bf16: head-sum selection matrix
    # TODO(synk): real BertEDARC also applies an attention_mask over padding tokens and
    #             token_type (segment) embeddings; omitted in this synthetic encoder.

    qkv_pad = wqkv_ref.shape[-1]       # 128

    # ---- encoder layers: activation carried as an SSA value (no VMEM scratch) ----
    # TODO(synk): at BERT-base scale, stream per-layer weights via a grid axis / emit_pipeline
    #             instead of keeping all layers resident (VMEM limit, esp. v7x 64 MiB).
    for l in range(num_layers):
        # fused QKV projection (single MXU pass; scale already folded into Wq/bq)
        qkv = _bdot(x, wqkv_ref[l]) + bqkv_ref[l]                        # (N, 128) f32
        qkv_bf = qkv.astype(bf16)

        # stacked-head attention: heads stacked along sublanes -> one softmax total.
        #   qh[h*N+n, :] = q[n, :] masked to head-h lanes of the Q block (lanes 0..H-1)
        qh = jnp.dot(rep, qkv_bf, preferred_element_type=jnp.float32) * mq_stack
        # half-width rotation (identical under either roll sign convention) brings the
        # K block (lanes 64..95) onto lanes 0..31, aligned with the Q-block head masks.
        k_al = pltpu.roll(qkv, shift=qkv_pad // 2, axis=1).astype(bf16)  # (N, 128)
        sc = jnp.einsum('sd,md->sm', qh.astype(bf16), k_al,
                        preferred_element_type=jnp.float32) + attn_bias  # (NH*N, N)

        mx = jnp.max(sc, axis=-1, keepdims=True)
        e = jnp.exp(sc - mx)
        p = e * pl.reciprocal(jnp.sum(e, axis=-1, keepdims=True), approx=True)

        # V consumed in place (lanes 96..127); head separation via mv_stack, head
        # re-combination via one (N, NH*N) selection matmul.
        pv = jnp.dot(p.astype(bf16), qkv_bf,
                     preferred_element_type=jnp.float32)                 # (NH*N, 128)
        ctx = jnp.dot(rep_t, (pv * mv_stack).astype(bf16),
                      preferred_element_type=jnp.float32)                # (N, 128)
        attn = _bdot(ctx, wo_ref[l]) + bo_ref[l]                         # (N, H)

        h1 = _layernorm(x + attn, ln1_g_ref[l], ln1_b_ref[l])
        ff = _gelu(_bdot(h1, w1_ref[l]) + b1_ref[l])
        ff = _bdot(ff, w2_ref[l]) + b2_ref[l]
        x = _layernorm(h1 + ff, ln2_g_ref[l], ln2_b_ref[l])

    # ---- CLS rows -> classifier -> cross-entropy, packed into one lane-dense slab ----
    cls = jnp.dot(cls_sel_ref[...], x.astype(bf16),
                  preferred_element_type=jnp.float32)                    # (rows_pad, H)
    logits = _bdot(cls, emo_w_ref[...]) + emo_b_ref[...]                 # (rows_pad, lane)

    col = jax.lax.broadcasted_iota(jnp.int32, (rows_pad, lane), 1)
    row = jax.lax.broadcasted_iota(jnp.int32, (rows_pad, lane), 0)
    masked = jnp.where(col < n_emo, logits, NEG_BIG)
    mx = jnp.max(masked, axis=-1, keepdims=True)
    lse = mx + jnp.log(jnp.sum(jnp.exp(masked - mx), axis=-1, keepdims=True))   # (rows_pad,1)
    picked = jnp.sum(jnp.where(col == labels_ref[...], logits, 0.0),
                     axis=-1, keepdims=True)                                    # (rows_pad,1)
    rvalid = jax.lax.broadcasted_iota(jnp.int32, (rows_pad, 1), 0) < batch
    per_row = jnp.where(rvalid, lse - picked, 0.0)
    loss11 = jnp.sum(per_row, axis=0, keepdims=True) * (1.0 / batch)            # (1,1) mean

    # single unmasked (8,128) store; scalar loss lives in the unused last padded row
    out_ref[...] = jnp.where(row == rows_pad - 1, loss11, logits)


# ----------------------------- wrapper -----------------------------------------------
def bert_edarc_erc_forward(params, input_ids, emo_labels):
    """ERC path of BertEDARC.forward: returns (loss, logits). Single pallas_call."""
    B, S = input_ids.shape
    N = B * S
    f32, bf16 = jnp.float32, jnp.bfloat16
    H, HD, NH, L = HIDDEN, HEAD_DIM, NUM_HEADS, NUM_LAYERS
    assert B < ROWS_PAD  # last padded row carries the scalar loss

    ids = input_ids.reshape(N, 1).astype(jnp.int32)
    labels = jnp.zeros((ROWS_PAD, 1), jnp.int32).at[:B, 0].set(emo_labels.astype(jnp.int32))

    # ---- trace-time constants / weight packing (hoisted out of the kernel) ----
    pos_ids = jnp.tile(jnp.arange(S, dtype=jnp.int32), B)
    pos_add = params['pos_emb'][pos_ids].astype(f32)                     # (N, H) folded positions

    bidx = jnp.repeat(jnp.arange(B, dtype=jnp.int32), S)
    attn_bias = jnp.where(bidx[:, None] == bidx[None, :], 0.0, NEG_BIG).astype(f32)  # (N, N)
    attn_bias_st = jnp.tile(attn_bias, (NH, 1))                          # (NH*N, N)

    lane128 = jnp.arange(QKV_PAD, dtype=jnp.int32)
    head_blk = jnp.repeat(jnp.arange(NH, dtype=jnp.int32), N)            # head id per stacked row
    mq_stack = ((lane128[None, :] // HD) == head_blk[:, None]).astype(f32)        # Q block lanes
    v_base = QKV_PAD - H                                                  # V block start (=96)
    mv_stack = ((lane128[None, :] >= v_base)
                & (((lane128[None, :] - v_base) // HD) == head_blk[:, None])).astype(f32)

    eye_n = jnp.eye(N, dtype=f32)
    rep = jnp.tile(eye_n, (NH, 1)).astype(bf16)                          # (NH*N, N)
    rep_t = jnp.tile(eye_n, (1, NH)).astype(bf16)                        # (N, NH*N)

    rows = jnp.arange(ROWS_PAD, dtype=jnp.int32)[:, None]
    cols = jnp.arange(N, dtype=jnp.int32)[None, :]
    cls_sel = ((rows < B) & (cols == rows * S)).astype(bf16)             # picks row b*S (CLS)

    # fused QKV weight: [Wq*scale | pad | Wk | Wv]; 1/sqrt(head_dim) folded into Wq/bq.
    scale = 1.0 / (HD ** 0.5)
    zpw = jnp.zeros((L, H, QKV_PAD - 3 * H), f32)
    zpb = jnp.zeros((L, 1, QKV_PAD - 3 * H), f32)
    wqkv = jnp.concatenate([params['wq'] * scale, zpw, params['wk'], params['wv']],
                           axis=-1).astype(bf16)                          # (L, H, 128)
    bqkv = jnp.concatenate([params['bq'] * scale, zpb, params['bk'], params['bv']],
                           axis=-1).astype(f32)                           # (L, 1, 128)
    wo_pad = jnp.zeros((L, QKV_PAD, H), f32).at[:, v_base:, :].set(params['wo']).astype(bf16)

    emo_w_pad = jnp.zeros((H, LANE), f32).at[:, :N_EMO].set(params['emo_w']).astype(bf16)
    emo_b_pad = jnp.zeros((1, LANE), f32).at[:, :N_EMO].set(params['emo_b'])

    args = (ids, labels,
            params['tok_emb'].astype(bf16), pos_add, params['emb_ln_g'], params['emb_ln_b'],
            attn_bias_st, mq_stack, mv_stack, rep, rep_t, cls_sel,
            wqkv, bqkv, wo_pad, params['bo'], params['ln1_g'], params['ln1_b'],
            params['w1'].astype(bf16), params['b1'], params['w2'].astype(bf16), params['b2'],
            params['ln2_g'], params['ln2_b'],
            emo_w_pad, emo_b_pad)

    kernel = functools.partial(
        bert_edarc_fused_kernel,
        batch=B, seq=S, num_layers=NUM_LAYERS,
        n_emo=N_EMO, rows_pad=ROWS_PAD, lane=LANE)

    # TODO(synk): when batching many utterances, add a parallel grid axis over token-row
    #             tiles (dimension_semantics=("parallel",...)) to use v7x's second TensorCore.
    slab = pl.pallas_call(
        kernel,
        out_shape=jax.ShapeDtypeStruct((ROWS_PAD, LANE), f32),
        in_specs=[_vmem() for _ in args],
        out_specs=_vmem(),
    )(*args)

    loss = slab[ROWS_PAD - 1, 0]
    logits = slab[:B, :N_EMO]
    # TODO(synk): DAC / EDAC heads (and get_losses_weights reweighting) follow the same
    # padded-slab head pattern; only the default task_name='ERC' is built here.
    return loss, logits


# ----------------------------- deterministic params ----------------------------------
def init_params(key):
    def nrm(k, shape, scale=0.02):
        return (scale * jax.random.normal(k, shape)).astype(jnp.float32)

    keys = jax.random.split(key, 9)
    L, H, F = NUM_LAYERS, HIDDEN, FFN_DIM
    params = {
        'tok_emb': nrm(keys[0], (VOCAB, H)),
        'pos_emb': nrm(keys[1], (MAX_POS, H)),
        'emb_ln_g': jnp.ones((1, H), jnp.float32),
        'emb_ln_b': jnp.zeros((1, H), jnp.float32),
        'emo_w': nrm(keys[2], (H, N_EMO)),          # (in, out) == nn.Linear(768, n_emo).weight.T
        'emo_b': jnp.zeros((1, N_EMO), jnp.float32),
        # stacked per-layer weights (leading layer axis)
        'wq': nrm(keys[3], (L, H, H)), 'bq': jnp.zeros((L, 1, H), jnp.float32),
        'wk': nrm(keys[4], (L, H, H)), 'bk': jnp.zeros((L, 1, H), jnp.float32),
        'wv': nrm(keys[5], (L, H, H)), 'bv': jnp.zeros((L, 1, H), jnp.float32),
        'wo': nrm(keys[6], (L, H, H)), 'bo': jnp.zeros((L, 1, H), jnp.float32),
        'ln1_g': jnp.ones((L, 1, H), jnp.float32), 'ln1_b': jnp.zeros((L, 1, H), jnp.float32),
        'w1': nrm(keys[7], (L, H, F)), 'b1': jnp.zeros((L, 1, F), jnp.float32),
        'w2': nrm(keys[8], (L, F, H)), 'b2': jnp.zeros((L, 1, H), jnp.float32),
        'ln2_g': jnp.ones((L, 1, H), jnp.float32), 'ln2_b': jnp.zeros((L, 1, H), jnp.float32),
    }
    return params


if __name__ == "__main__":
    key = jax.random.PRNGKey(0)
    pkey, ikey, lkey = jax.random.split(key, 3)
    params = init_params(pkey)

    input_ids = jax.random.randint(ikey, (BATCH, SEQ), 0, VOCAB, dtype=jnp.int32)
    emo_labels = jax.random.randint(lkey, (BATCH,), 0, N_EMO, dtype=jnp.int32)

    fwd = jax.jit(bert_edarc_erc_forward)
    loss, logits = fwd(params, input_ids, emo_labels)
    jax.block_until_ready((loss, logits))

    assert logits.shape == (BATCH, N_EMO)
    assert loss.shape == () and bool(jnp.isfinite(loss))
    print("KERNEL_OK")
</pallas_src>

<mosaic_0001>
module attributes {stable_mosaic.version = 11 : i64} {
  func.func @bert_edarc_fused_kernel(%arg0: memref<16x1xi32, #tpu.memory_space<vmem>>, %arg1: memref<8x1xi32, #tpu.memory_space<vmem>>, %arg2: memref<50x32xbf16, #tpu.memory_space<vmem>>, %arg3: memref<16x32xf32, #tpu.memory_space<vmem>>, %arg4: memref<1x32xf32, #tpu.memory_space<vmem>>, %arg5: memref<1x32xf32, #tpu.memory_space<vmem>>, %arg6: memref<64x16xf32, #tpu.memory_space<vmem>>, %arg7: memref<64x128xf32, #tpu.memory_space<vmem>>, %arg8: memref<64x128xf32, #tpu.memory_space<vmem>>, %arg9: memref<64x16xbf16, #tpu.memory_space<vmem>>, %arg10: memref<16x64xbf16, #tpu.memory_space<vmem>>, %arg11: memref<8x16xbf16, #tpu.memory_space<vmem>>, %arg12: memref<2x32x128xbf16, #tpu.memory_space<vmem>>, %arg13: memref<2x1x128xf32, #tpu.memory_space<vmem>>, %arg14: memref<2x128x32xbf16, #tpu.memory_space<vmem>>, %arg15: memref<2x1x32xf32, #tpu.memory_space<vmem>>, %arg16: memref<2x1x32xf32, #tpu.memory_space<vmem>>, %arg17: memref<2x1x32xf32, #tpu.memory_space<vmem>>, %arg18: memref<2x32x64xbf16, #tpu.memory_space<vmem>>, %arg19: memref<2x1x64xf32, #tpu.memory_space<vmem>>, %arg20: memref<2x64x32xbf16, #tpu.memory_space<vmem>>, %arg21: memref<2x1x32xf32, #tpu.memory_space<vmem>>, %arg22: memref<2x1x32xf32, #tpu.memory_space<vmem>>, %arg23: memref<2x1x32xf32, #tpu.memory_space<vmem>>, %arg24: memref<32x128xbf16, #tpu.memory_space<vmem>>, %arg25: memref<1x128xf32, #tpu.memory_space<vmem>>, %arg26: memref<8x128xf32, #tpu.memory_space<vmem>>) attributes {dimension_semantics = [], scalar_prefetch = 0 : i64, scratch_operands = 0 : i64, tpu.core_type = #tpu.core_type<tc>} {
    %0 = tpu.iota {dimensions = array<i32: 1>} : vector<16x50xi32>
    %c0 = arith.constant 0 : index
    %c0_0 = arith.constant 0 : index
    %1 = vector.load %arg0[%c0, %c0_0] : memref<16x1xi32, #tpu.memory_space<vmem>>, vector<16x1xi32>
    %2 = vector.broadcast %1 : vector<16x1xi32> to vector<16x50xi32>
    %3 = arith.cmpi eq, %0, %2 : vector<16x50xi32>
    %4 = arith.extui %3 : vector<16x50xi1> to vector<16x50xi32>
    %5 = arith.sitofp %4 : vector<16x50xi32> to vector<16x50xf32>
    %6 = arith.truncf %5 : vector<16x50xf32> to vector<16x50xbf16>
    %c0_1 = arith.constant 0 : index
    %c0_2 = arith.constant 0 : index
    %7 = vector.load %arg2[%c0_1, %c0_2] : memref<50x32xbf16, #tpu.memory_space<vmem>>, vector<50x32xbf16>
    %cst = arith.constant dense<0.000000e+00> : vector<16x32xf32>
    %8 = tpu.matmul %6, %7, %cst {dimension_numbers = #tpu.dot_dimension_numbers<[1], [0], [0], [1], [0, 0, 1, 1], [], []>} : vector<16x50xbf16>, vector<50x32xbf16>, vector<16x32xf32> -> vector<16x32xf32>
    %c0_3 = arith.constant 0 : index
    %c0_4 = arith.constant 0 : index
    %9 = vector.load %arg3[%c0_3, %c0_4] : memref<16x32xf32, #tpu.memory_space<vmem>>, vector<16x32xf32>
    %10 = arith.addf %8, %9 : vector<16x32xf32>
    %c0_5 = arith.constant 0 : index
    %c0_6 = arith.constant 0 : index
    %11 = vector.load %arg4[%c0_5, %c0_6] : memref<1x32xf32, #tpu.memory_space<vmem>>, vector<1x32xf32>
    %c0_7 = arith.constant 0 : index
    %c0_8 = arith.constant 0 : index
    %12 = vector.load %arg5[%c0_7, %c0_8] : memref<1x32xf32, #tpu.memory_space<vmem>>, vector<1x32xf32>
    %cst_9 = arith.constant dense<0.000000e+00> : vector<16xf32>
    %13 = vector.multi_reduction <add>, %10, %cst_9 [1] : vector<16x32xf32> to vector<16xf32>
    %14 = vector.shape_cast %13 : vector<16xf32> to vector<16x1xf32>
    %cst_10 = arith.constant 3.200000e+01 : f32
    %15 = vector.broadcast %cst_10 : f32 to vector<16x1xf32>
    %16 = arith.divf %14, %15 : vector<16x1xf32>
    %17 = arith.mulf %10, %10 : vector<16x32xf32>
    %cst_11 = arith.constant dense<0.000000e+00> : vector<16xf32>
    %18 = vector.multi_reduction <add>, %17, %cst_11 [1] : vector<16x32xf32> to vector<16xf32>
    %19 = vector.shape_cast %18 : vector<16xf32> to vector<16x1xf32>
    %cst_12 = arith.constant 3.200000e+01 : f32
    %20 = vector.broadcast %cst_12 : f32 to vector<16x1xf32>
    %21 = arith.divf %19, %20 : vector<16x1xf32>
    %22 = arith.mulf %16, %16 : vector<16x1xf32>
    %23 = arith.subf %21, %22 : vector<16x1xf32>
    %24 = vector.broadcast %16 : vector<16x1xf32> to vector<16x32xf32>
    %25 = arith.subf %10, %24 : vector<16x32xf32>
    %cst_13 = arith.constant 9.99999996E-13 : f32
    %26 = vector.broadcast %cst_13 : f32 to vector<16x1xf32>
    %27 = arith.addf %23, %26 : vector<16x1xf32>
    %28 = math.rsqrt %27 : vector<16x1xf32>
    %29 = vector.broadcast %28 : vector<16x1xf32> to vector<16x32xf32>
    %30 = arith.mulf %25, %29 : vector<16x32xf32>
    %31 = vector.broadcast %11 : vector<1x32xf32> to vector<16x32xf32>
    %32 = arith.mulf %30, %31 : vector<16x32xf32>
    %33 = vector.broadcast %12 : vector<1x32xf32> to vector<16x32xf32>
    %34 = arith.addf %32, %33 : vector<16x32xf32>
    %c0_14 = arith.constant 0 : index
    %c0_15 = arith.constant 0 : index
    %35 = vector.load %arg6[%c0_14, %c0_15] : memref<64x16xf32, #tpu.memory_space<vmem>>, vector<64x16xf32>
    %c0_16 = arith.constant 0 : index
    %c0_17 = arith.constant 0 : index
    %36 = vector.load %arg7[%c0_16, %c0_17] : memref<64x128xf32, #tpu.memory_space<vmem>>, vector<64x128xf32>
    %c0_18 = arith.constant 0 : index
    %c0_19 = arith.constant 0 : index
    %37 = vector.load %arg8[%c0_18, %c0_19] : memref<64x128xf32, #tpu.memory_space<vmem>>, vector<64x128xf32>
    %c0_20 = arith.constant 0 : index
    %c0_21 = arith.constant 0 : index
    %38 = vector.load %arg9[%c0_20, %c0_21] : memref<64x16xbf16, #tpu.memory_space<vmem>>, vector<64x16xbf16>
    %c0_22 = arith.constant 0 : index
    %c0_23 = arith.constant 0 : index
    %39 = vector.load %arg10[%c0_22, %c0_23] : memref<16x64xbf16, #tpu.memory_space<vmem>>, vector<16x64xbf16>
    %c0_24 = arith.constant 0 : index
    %c0_25 = arith.constant 0 : index
    %c0_26 = arith.constant 0 : index
    %40 = vector.load %arg12[%c0_24, %c0_25, %c0_26] : memref<2x32x128xbf16, #tpu.memory_space<vmem>>, vector<1x32x128xbf16>
    %41 = vector.shape_cast %40 : vector<1x32x128xbf16> to vector<32x128xbf16>
    %42 = arith.truncf %34 : vector<16x32xf32> to vector<16x32xbf16>
    %cst_27 = arith.constant dense<0.000000e+00> : vector<16x128xf32>
    %43 = tpu.matmul %42, %41, %cst_27 {dimension_numbers = #tpu.dot_dimension_numbers<[1], [0], [0], [1], [0, 0, 1, 1], [], []>} : vector<16x32xbf16>, vector<32x128xbf16>, vector<16x128xf32> -> vector<16x128xf32>
    %c0_28 = arith.constant 0 : index
    %c0_29 = arith.constant 0 : index
    %c0_30 = arith.constant 0 : index
    %44 = vector.load %arg13[%c0_28, %c0_29, %c0_30] : memref<2x1x128xf32, #tpu.memory_space<vmem>>, vector<1x1x128xf32>
    %45 = vector.shape_cast %44 : vector<1x1x128xf32> to vector<1x128xf32>
    %46 = vector.broadcast %45 : vector<1x128xf32> to vector<16x128xf32>
    %47 = arith.addf %43, %46 : vector<16x128xf32>
    %48 = arith.truncf %47 : vector<16x128xf32> to vector<16x128xbf16>
    %cst_31 = arith.constant dense<0.000000e+00> : vector<64x128xf32>
    %49 = tpu.matmul %38, %48, %cst_31 {dimension_numbers = #tpu.dot_dimension_numbers<[1], [0], [0], [1], [0, 0, 1, 1], [], []>} : vector<64x16xbf16>, vector<16x128xbf16>, vector<64x128xf32> -> vector<64x128xf32>
    %50 = arith.mulf %49, %36 : vector<64x128xf32>
    %c64_i32 = arith.constant 64 : i32
    %51 = tpu.dynamic_rotate %47 by %c64_i32 dim 1 : vector<16x128xf32>, i32 -> vector<16x128xf32>
    %52 = arith.truncf %51 : vector<16x128xf32> to vector<16x128xbf16>
    %53 = arith.truncf %50 : vector<64x128xf32> to vector<64x128xbf16>
    "tpu.trace_start"() <{level = 10 : i32, message = "sd,md->sm"}> : () -> ()
    %cst_32 = arith.constant dense<0.000000e+00> : vector<64x16xf32>
    %54 = tpu.matmul %53, %52, %cst_32 {dimension_numbers = #tpu.dot_dimension_numbers<[1], [1], [0], [0], [0, 0, 1, 0], [], []>} : vector<64x128xbf16>, vector<16x128xbf16>, vector<64x16xf32> -> vector<64x16xf32>
    "tpu.trace_stop"() : () -> ()
    %55 = arith.addf %54, %35 : vector<64x16xf32>
    %cst_33 = arith.constant dense<0xFF800000> : vector<64xf32>
    %56 = vector.multi_reduction <maximumf>, %55, %cst_33 [1] : vector<64x16xf32> to vector<64xf32>
    %57 = vector.shape_cast %56 : vector<64xf32> to vector<64x1xf32>
    %58 = vector.broadcast %57 : vector<64x1xf32> to vector<64x16xf32>
    %59 = arith.subf %55, %58 : vector<64x16xf32>
    %60 = math.exp %59 : vector<64x16xf32>
    %cst_34 = arith.constant dense<0.000000e+00> : vector<64xf32>
    %61 = vector.multi_reduction <add>, %60, %cst_34 [1] : vector<64x16xf32> to vector<64xf32>
    %62 = vector.shape_cast %61 : vector<64xf32> to vector<64x1xf32>
    %63 = tpu.reciprocal %62 {approx = true} : vector<64x1xf32> -> vector<64x1xf32>
    %64 = vector.broadcast %63 : vector<64x1xf32> to vector<64x16xf32>
    %65 = arith.mulf %60, %64 : vector<64x16xf32>
    %66 = arith.truncf %65 : vector<64x16xf32> to vector<64x16xbf16>
    %cst_35 = arith.constant dense<0.000000e+00> : vector<64x128xf32>
    %67 = tpu.matmul %66, %48, %cst_35 {dimension_numbers = #tpu.dot_dimension_numbers<[1], [0], [0], [1], [0, 0, 1, 1], [], []>} : vector<64x16xbf16>, vector<16x128xbf16>, vector<64x128xf32> -> vector<64x128xf32>
    %68 = arith.mulf %67, %37 : vector<64x128xf32>
    %69 = arith.truncf %68 : vector<64x128xf32> to vector<64x128xbf16>
    %cst_36 = arith.constant dense<0.000000e+00> : vector<16x128xf32>
    %70 = tpu.matmul %39, %69, %cst_36 {dimension_numbers = #tpu.dot_dimension_numbers<[1], [0], [0], [1], [0, 0, 1, 1], [], []>} : vector<16x64xbf16>, vector<64x128xbf16>, vector<16x128xf32> -> vector<16x128xf32>
    %c0_37 = arith.constant 0 : index
    %c0_38 = arith.constant 0 : index
    %c0_39 = arith.constant 0 : index
    %71 = vector.load %arg14[%c0_37, %c0_38, %c0_39] : memref<2x128x32xbf16, #tpu.memory_space<vmem>>, vector<1x128x32xbf16>
    %72 = vector.shape_cast %71 : vector<1x128x32xbf16> to vector<128x32xbf16>
    %73 = arith.truncf %70 : vector<16x128xf32> to vector<16x128xbf16>
    %cst_40 = arith.constant dense<0.000000e+00> : vector<16x32xf32>
    %74 = tpu.matmul %73, %72, %cst_40 {dimension_numbers = #tpu.dot_dimension_numbers<[1], [0], [0], [1], [0, 0, 1, 1], [], []>} : vector<16x128xbf16>, vector<128x32xbf16>, vector<16x32xf32> -> vector<16x32xf32>
    %c0_41 = arith.constant 0 : index
    %c0_42 = arith.constant 0 : index
    %c0_43 = arith.constant 0 : index
    %75 = vector.load %arg15[%c0_41, %c0_42, %c0_43] : memref<2x1x32xf32, #tpu.memory_space<vmem>>, vector<1x1x32xf32>
    %76 = vector.shape_cast %75 : vector<1x1x32xf32> to vector<1x32xf32>
    %77 = vector.broadcast %76 : vector<1x32xf32> to vector<16x32xf32>
    %78 = arith.addf %74, %77 : vector<16x32xf32>
    %79 = arith.addf %34, %78 : vector<16x32xf32>
    %c0_44 = arith.constant 0 : index
    %c0_45 = arith.constant 0 : index
    %c0_46 = arith.constant 0 : index
    %80 = vector.load %arg16[%c0_44, %c0_45, %c0_46] : memref<2x1x32xf32, #tpu.memory_space<vmem>>, vector<1x1x32xf32>
    %81 = vector.shape_cast %80 : vector<1x1x32xf32> to vector<1x32xf32>
    %c0_47 = arith.constant 0 : index
    %c0_48 = arith.constant 0 : index
    %c0_49 = arith.constant 0 : index
    %82 = vector.load %arg17[%c0_47, %c0_48, %c0_49] : memref<2x1x32xf32, #tpu.memory_space<vmem>>, vector<1x1x32xf32>
    %83 = vector.shape_cast %82 : vector<1x1x32xf32> to vector<1x32xf32>
    %cst_50 = arith.constant dense<0.000000e+00> : vector<16xf32>
    %84 = vector.multi_reduction <add>, %79, %cst_50 [1] : vector<16x32xf32> to vector<16xf32>
    %85 = vector.shape_cast %84 : vector<16xf32> to vector<16x1xf32>
    %cst_51 = arith.constant 3.200000e+01 : f32
    %86 = vector.broadcast %cst_51 : f32 to vector<16x1xf32>
    %87 = arith.divf %85, %86 : vector<16x1xf32>
    %88 = arith.mulf %79, %79 : vector<16x32xf32>
    %cst_52 = arith.constant dense<0.000000e+00> : vector<16xf32>
    %89 = vector.multi_reduction <add>, %88, %cst_52 [1] : vector<16x32xf32> to vector<16xf32>
    %90 = vector.shape_cast %89 : vector<16xf32> to vector<16x1xf32>
    %cst_53 = arith.constant 3.200000e+01 : f32
    %91 = vector.broadcast %cst_53 : f32 to vector<16x1xf32>
    %92 = arith.divf %90, %91 : vector<16x1xf32>
    %93 = arith.mulf %87, %87 : vector<16x1xf32>
    %94 = arith.subf %92, %93 : vector<16x1xf32>
    %95 = vector.broadcast %87 : vector<16x1xf32> to vector<16x32xf32>
    %96 = arith.subf %79, %95 : vector<16x32xf32>
    %cst_54 = arith.constant 9.99999996E-13 : f32
    %97 = vector.broadcast %cst_54 : f32 to vector<16x1xf32>
    %98 = arith.addf %94, %97 : vector<16x1xf32>
    %99 = math.rsqrt %98 : vector<16x1xf32>
    %100 = vector.broadcast %99 : vector<16x1xf32> to vector<16x32xf32>
    %101 = arith.mulf %96, %100 : vector<16x32xf32>
    %102 = vector.broadcast %81 : vector<1x32xf32> to vector<16x32xf32>
    %103 = arith.mulf %101, %102 : vector<16x32xf32>
    %104 = vector.broadcast %83 : vector<1x32xf32> to vector<16x32xf32>
    %105 = arith.addf %103, %104 : vector<16x32xf32>
    %c0_55 = arith.constant 0 : index
    %c0_56 = arith.constant 0 : index
    %c0_57 = arith.constant 0 : index
    %106 = vector.load %arg18[%c0_55, %c0_56, %c0_57] : memref<2x32x64xbf16, #tpu.memory_space<vmem>>, vector<1x32x64xbf16>
    %107 = vector.shape_cast %106 : vector<1x32x64xbf16> to vector<32x64xbf16>
    %108 = arith.truncf %105 : vector<16x32xf32> to vector<16x32xbf16>
    %cst_58 = arith.constant dense<0.000000e+00> : vector<16x64xf32>
    %109 = tpu.matmul %108, %107, %cst_58 {dimension_numbers = #tpu.dot_dimension_numbers<[1], [0], [0], [1], [0, 0, 1, 1], [], []>} : vector<16x32xbf16>, vector<32x64xbf16>, vector<16x64xf32> -> vector<16x64xf32>
    %c0_59 = arith.constant 0 : index
    %c0_60 = arith.constant 0 : index
    %c0_61 = arith.constant 0 : index
    %110 = vector.load %arg19[%c0_59, %c0_60, %c0_61] : memref<2x1x64xf32, #tpu.memory_space<vmem>>, vector<1x1x64xf32>
    %111 = vector.shape_cast %110 : vector<1x1x64xf32> to vector<1x64xf32>
    %112 = vector.broadcast %111 : vector<1x64xf32> to vector<16x64xf32>
    %113 = arith.addf %109, %112 : vector<16x64xf32>
    %cst_62 = arith.constant 5.000000e-01 : f32
    %114 = vector.broadcast %cst_62 : f32 to vector<16x64xf32>
    %115 = arith.mulf %114, %113 : vector<16x64xf32>
    %cst_63 = arith.constant 4.471500e-02 : f32
    %116 = vector.broadcast %cst_63 : f32 to vector<16x64xf32>
    %117 = arith.mulf %116, %113 : vector<16x64xf32>
    %118 = arith.mulf %117, %113 : vector<16x64xf32>
    %119 = arith.mulf %118, %113 : vector<16x64xf32>
    %120 = arith.addf %113, %119 : vector<16x64xf32>
    %cst_64 = arith.constant 0.797884583 : f32
    %121 = vector.broadcast %cst_64 : f32 to vector<16x64xf32>
    %122 = arith.mulf %121, %120 : vector<16x64xf32>
    %123 = math.tanh %122 : vector<16x64xf32>
    %cst_65 = arith.constant 1.000000e+00 : f32
    %124 = vector.broadcast %cst_65 : f32 to vector<16x64xf32>
    %125 = arith.addf %124, %123 : vector<16x64xf32>
    %126 = arith.mulf %115, %125 : vector<16x64xf32>
    %c0_66 = arith.constant 0 : index
    %c0_67 = arith.constant 0 : index
    %c0_68 = arith.constant 0 : index
    %127 = vector.load %arg20[%c0_66, %c0_67, %c0_68] : memref<2x64x32xbf16, #tpu.memory_space<vmem>>, vector<1x64x32xbf16>
    %128 = vector.shape_cast %127 : vector<1x64x32xbf16> to vector<64x32xbf16>
    %129 = arith.truncf %126 : vector<16x64xf32> to vector<16x64xbf16>
    %cst_69 = arith.constant dense<0.000000e+00> : vector<16x32xf32>
    %130 = tpu.matmul %129, %128, %cst_69 {dimension_numbers = #tpu.dot_dimension_numbers<[1], [0], [0], [1], [0, 0, 1, 1], [], []>} : vector<16x64xbf16>, vector<64x32xbf16>, vector<16x32xf32> -> vector<16x32xf32>
    %c0_70 = arith.constant 0 : index
    %c0_71 = arith.constant 0 : index
    %c0_72 = arith.constant 0 : index
    %131 = vector.load %arg21[%c0_70, %c0_71, %c0_72] : memref<2x1x32xf32, #tpu.memory_space<vmem>>, vector<1x1x32xf32>
    %132 = vector.shape_cast %131 : vector<1x1x32xf32> to vector<1x32xf32>
    %133 = vector.broadcast %132 : vector<1x32xf32> to vector<16x32xf32>
    %134 = arith.addf %130, %133 : vector<16x32xf32>
    %135 = arith.addf %105, %134 : vector<16x32xf32>
    %c0_73 = arith.constant 0 : index
    %c0_74 = arith.constant 0 : index
    %c0_75 = arith.constant 0 : index
    %136 = vector.load %arg22[%c0_73, %c0_74, %c0_75] : memref<2x1x32xf32, #tpu.memory_space<vmem>>, vector<1x1x32xf32>
    %137 = vector.shape_cast %136 : vector<1x1x32xf32> to vector<1x32xf32>
    %c0_76 = arith.constant 0 : index
    %c0_77 = arith.constant 0 : index
    %c0_78 = arith.constant 0 : index
    %138 = vector.load %arg23[%c0_76, %c0_77, %c0_78] : memref<2x1x32xf32, #tpu.memory_space<vmem>>, vector<1x1x32xf32>
    %139 = vector.shape_cast %138 : vector<1x1x32xf32> to vector<1x32xf32>
    %cst_79 = arith.constant dense<0.000000e+00> : vector<16xf32>
    %140 = vector.multi_reduction <add>, %135, %cst_79 [1] : vector<16x32xf32> to vector<16xf32>
    %141 = vector.shape_cast %140 : vector<16xf32> to vector<16x1xf32>
    %cst_80 = arith.constant 3.200000e+01 : f32
    %142 = vector.broadcast %cst_80 : f32 to vector<16x1xf32>
    %143 = arith.divf %141, %142 : vector<16x1xf32>
    %144 = arith.mulf %135, %135 : vector<16x32xf32>
    %cst_81 = arith.constant dense<0.000000e+00> : vector<16xf32>
    %145 = vector.multi_reduction <add>, %144, %cst_81 [1] : vector<16x32xf32> to vector<16xf32>
    %146 = vector.shape_cast %145 : vector<16xf32> to vector<16x1xf32>
    %cst_82 = arith.constant 3.200000e+01 : f32
    %147 = vector.broadcast %cst_82 : f32 to vector<16x1xf32>
    %148 = arith.divf %146, %147 : vector<16x1xf32>
    %149 = arith.mulf %143, %143 : vector<16x1xf32>
    %150 = arith.subf %148, %149 : vector<16x1xf32>
    %151 = vector.broadcast %143 : vector<16x1xf32> to vector<16x32xf32>
    %152 = arith.subf %135, %151 : vector<16x32xf32>
    %cst_83 = arith.constant 9.99999996E-13 : f32
    %153 = vector.broadcast %cst_83 : f32 to vector<16x1xf32>
    %154 = arith.addf %150, %153 : vector<16x1xf32>
    %155 = math.rsqrt %154 : vector<16x1xf32>
    %156 = vector.broadcast %155 : vector<16x1xf32> to vector<16x32xf32>
    %157 = arith.mulf %152, %156 : vector<16x32xf32>
    %158 = vector.broadcast %137 : vector<1x32xf32> to vector<16x32xf32>
    %159 = arith.mulf %157, %158 : vector<16x32xf32>
    %160 = vector.broadcast %139 : vector<1x32xf32> to vector<16x32xf32>
    %161 = arith.addf %159, %160 : vector<16x32xf32>
    %c1 = arith.constant 1 : index
    %c0_84 = arith.constant 0 : index
    %c0_85 = arith.constant 0 : index
    %162 = vector.load %arg12[%c1, %c0_84, %c0_85] : memref<2x32x128xbf16, #tpu.memory_space<vmem>>, vector<1x32x128xbf16>
    %163 = vector.shape_cast %162 : vector<1x32x128xbf16> to vector<32x128xbf16>
    %164 = arith.truncf %161 : vector<16x32xf32> to vector<16x32xbf16>
    %cst_86 = arith.constant dense<0.000000e+00> : vector<16x128xf32>
    %165 = tpu.matmul %164, %163, %cst_86 {dimension_numbers = #tpu.dot_dimension_numbers<[1], [0], [0], [1], [0, 0, 1, 1], [], []>} : vector<16x32xbf16>, vector<32x128xbf16>, vector<16x128xf32> -> vector<16x128xf32>
    %c1_87 = arith.constant 1 : index
    %c0_88 = arith.constant 0 : index
    %c0_89 = arith.constant 0 : index
    %166 = vector.load %arg13[%c1_87, %c0_88, %c0_89] : memref<2x1x128xf32, #tpu.memory_space<vmem>>, vector<1x1x128xf32>
    %167 = vector.shape_cast %166 : vector<1x1x128xf32> to vector<1x128xf32>
    %168 = vector.broadcast %167 : vector<1x128xf32> to vector<16x128xf32>
    %169 = arith.addf %165, %168 : vector<16x128xf32>
    %170 = arith.truncf %169 : vector<16x128xf32> to vector<16x128xbf16>
    %cst_90 = arith.constant dense<0.000000e+00> : vector<64x128xf32>
    %171 = tpu.matmul %38, %170, %cst_90 {dimension_numbers = #tpu.dot_dimension_numbers<[1], [0], [0], [1], [0, 0, 1, 1], [], []>} : vector<64x16xbf16>, vector<16x128xbf16>, vector<64x128xf32> -> vector<64x128xf32>
    %172 = arith.mulf %171, %36 : vector<64x128xf32>
    %c64_i32_91 = arith.constant 64 : i32
    %173 = tpu.dynamic_rotate %169 by %c64_i32_91 dim 1 : vector<16x128xf32>, i32 -> vector<16x128xf32>
    %174 = arith.truncf %173 : vector<16x128xf32> to vector<16x128xbf16>
    %175 = arith.truncf %172 : vector<64x128xf32> to vector<64x128xbf16>
    "tpu.trace_start"() <{level = 10 : i32, message = "sd,md->sm"}> : () -> ()
    %cst_92 = arith.constant dense<0.000000e+00> : vector<64x16xf32>
    %176 = tpu.matmul %175, %174, %cst_92 {dimension_numbers = #tpu.dot_dimension_numbers<[1], [1], [0], [0], [0, 0, 1, 0], [], []>} : vector<64x128xbf16>, vector<16x128xbf16>, vector<64x16xf32> -> vector<64x16xf32>
    "tpu.trace_stop"() : () -> ()
    %177 = arith.addf %176, %35 : vector<64x16xf32>
    %cst_93 = arith.constant dense<0xFF800000> : vector<64xf32>
    %178 = vector.multi_reduction <maximumf>, %177, %cst_93 [1] : vector<64x16xf32> to vector<64xf32>
    %179 = vector.shape_cast %178 : vector<64xf32> to vector<64x1xf32>
    %180 = vector.broadcast %179 : vector<64x1xf32> to vector<64x16xf32>
    %181 = arith.subf %177, %180 : vector<64x16xf32>
    %182 = math.exp %181 : vector<64x16xf32>
    %cst_94 = arith.constant dense<0.000000e+00> : vector<64xf32>
    %183 = vector.multi_reduction <add>, %182, %cst_94 [1] : vector<64x16xf32> to vector<64xf32>
    %184 = vector.shape_cast %183 : vector<64xf32> to vector<64x1xf32>
    %185 = tpu.reciprocal %184 {approx = true} : vector<64x1xf32> -> vector<64x1xf32>
    %186 = vector.broadcast %185 : vector<64x1xf32> to vector<64x16xf32>
    %187 = arith.mulf %182, %186 : vector<64x16xf32>
    %188 = arith.truncf %187 : vector<64x16xf32> to vector<64x16xbf16>
    %cst_95 = arith.constant dense<0.000000e+00> : vector<64x128xf32>
    %189 = tpu.matmul %188, %170, %cst_95 {dimension_numbers = #tpu.dot_dimension_numbers<[1], [0], [0], [1], [0, 0, 1, 1], [], []>} : vector<64x16xbf16>, vector<16x128xbf16>, vector<64x128xf32> -> vector<64x128xf32>
    %190 = arith.mulf %189, %37 : vector<64x128xf32>
    %191 = arith.truncf %190 : vector<64x128xf32> to vector<64x128xbf16>
    %cst_96 = arith.constant dense<0.000000e+00> : vector<16x128xf32>
    %192 = tpu.matmul %39, %191, %cst_96 {dimension_numbers = #tpu.dot_dimension_numbers<[1], [0], [0], [1], [0, 0, 1, 1], [], []>} : vector<16x64xbf16>, vector<64x128xbf16>, vector<16x128xf32> -> vector<16x128xf32>
    %c1_97 = arith.constant 1 : index
    %c0_98 = arith.constant 0 : index
    %c0_99 = arith.constant 0 : index
    %193 = vector.load %arg14[%c1_97, %c0_98, %c0_99] : memref<2x128x32xbf16, #tpu.memory_space<vmem>>, vector<1x128x32xbf16>
    %194 = vector.shape_cast %193 : vector<1x128x32xbf16> to vector<128x32xbf16>
    %195 = arith.truncf %192 : vector<16x128xf32> to vector<16x128xbf16>
    %cst_100 = arith.constant dense<0.000000e+00> : vector<16x32xf32>
    %196 = tpu.matmul %195, %194, %cst_100 {dimension_numbers = #tpu.dot_dimension_numbers<[1], [0], [0], [1], [0, 0, 1, 1], [], []>} : vector<16x128xbf16>, vector<128x32xbf16>, vector<16x32xf32> -> vector<16x32xf32>
    %c1_101 = arith.constant 1 : index
    %c0_102 = arith.constant 0 : index
    %c0_103 = arith.constant 0 : index
    %197 = vector.load %arg15[%c1_101, %c0_102, %c0_103] : memref<2x1x32xf32, #tpu.memory_space<vmem>>, vector<1x1x32xf32>
    %198 = vector.shape_cast %197 : vector<1x1x32xf32> to vector<1x32xf32>
    %199 = vector.broadcast %198 : vector<1x32xf32> to vector<16x32xf32>
    %200 = arith.addf %196, %199 : vector<16x32xf32>
    %201 = arith.addf %161, %200 : vector<16x32xf32>
    %c1_104 = arith.constant 1 : index
    %c0_105 = arith.constant 0 : index
    %c0_106 = arith.constant 0 : index
    %202 = vector.load %arg16[%c1_104, %c0_105, %c0_106] : memref<2x1x32xf32, #tpu.memory_space<vmem>>, vector<1x1x32xf32>
    %203 = vector.shape_cast %202 : vector<1x1x32xf32> to vector<1x32xf32>
    %c1_107 = arith.constant 1 : index
    %c0_108 = arith.constant 0 : index
    %c0_109 = arith.constant 0 : index
    %204 = vector.load %arg17[%c1_107, %c0_108, %c0_109] : memref<2x1x32xf32, #tpu.memory_space<vmem>>, vector<1x1x32xf32>
    %205 = vector.shape_cast %204 : vector<1x1x32xf32> to vector<1x32xf32>
    %cst_110 = arith.constant dense<0.000000e+00> : vector<16xf32>
    %206 = vector.multi_reduction <add>, %201, %cst_110 [1] : vector<16x32xf32> to vector<16xf32>
    %207 = vector.shape_cast %206 : vector<16xf32> to vector<16x1xf32>
    %cst_111 = arith.constant 3.200000e+01 : f32
    %208 = vector.broadcast %cst_111 : f32 to vector<16x1xf32>
    %209 = arith.divf %207, %208 : vector<16x1xf32>
    %210 = arith.mulf %201, %201 : vector<16x32xf32>
    %cst_112 = arith.constant dense<0.000000e+00> : vector<16xf32>
    %211 = vector.multi_reduction <add>, %210, %cst_112 [1] : vector<16x32xf32> to vector<16xf32>
    %212 = vector.shape_cast %211 : vector<16xf32> to vector<16x1xf32>
    %cst_113 = arith.constant 3.200000e+01 : f32
    %213 = vector.broadcast %cst_113 : f32 to vector<16x1xf32>
    %214 = arith.divf %212, %213 : vector<16x1xf32>
    %215 = arith.mulf %209, %209 : vector<16x1xf32>
    %216 = arith.subf %214, %215 : vector<16x1xf32>
    %217 = vector.broadcast %209 : vector<16x1xf32> to vector<16x32xf32>
    %218 = arith.subf %201, %217 : vector<16x32xf32>
    %cst_114 = arith.constant 9.99999996E-13 : f32
    %219 = vector.broadcast %cst_114 : f32 to vector<16x1xf32>
    %220 = arith.addf %216, %219 : vector<16x1xf32>
    %221 = math.rsqrt %220 : vector<16x1xf32>
    %222 = vector.broadcast %221 : vector<16x1xf32> to vector<16x32xf32>
    %223 = arith.mulf %218, %222 : vector<16x32xf32>
    %224 = vector.broadcast %203 : vector<1x32xf32> to vector<16x32xf32>
    %225 = arith.mulf %223, %224 : vector<16x32xf32>
    %226 = vector.broadcast %205 : vector<1x32xf32> to vector<16x32xf32>
    %227 = arith.addf %225, %226 : vector<16x32xf32>
    %c1_115 = arith.constant 1 : index
    %c0_116 = arith.constant 0 : index
    %c0_117 = arith.constant 0 : index
    %228 = vector.load %arg18[%c1_115, %c0_116, %c0_117] : memref<2x32x64xbf16, #tpu.memory_space<vmem>>, vector<1x32x64xbf16>
    %229 = vector.shape_cast %228 : vector<1x32x64xbf16> to vector<32x64xbf16>
    %230 = arith.truncf %227 : vector<16x32xf32> to vector<16x32xbf16>
    %cst_118 = arith.constant dense<0.000000e+00> : vector<16x64xf32>
    %231 = tpu.matmul %230, %229, %cst_118 {dimension_numbers = #tpu.dot_dimension_numbers<[1], [0], [0], [1], [0, 0, 1, 1], [], []>} : vector<16x32xbf16>, vector<32x64xbf16>, vector<16x64xf32> -> vector<16x64xf32>
    %c1_119 = arith.constant 1 : index
    %c0_120 = arith.constant 0 : index
    %c0_121 = arith.constant 0 : index
    %232 = vector.load %arg19[%c1_119, %c0_120, %c0_121] : memref<2x1x64xf32, #tpu.memory_space<vmem>>, vector<1x1x64xf32>
    %233 = vector.shape_cast %232 : vector<1x1x64xf32> to vector<1x64xf32>
    %234 = vector.broadcast %233 : vector<1x64xf32> to vector<16x64xf32>
    %235 = arith.addf %231, %234 : vector<16x64xf32>
    %cst_122 = arith.constant 5.000000e-01 : f32
    %236 = vector.broadcast %cst_122 : f32 to vector<16x64xf32>
    %237 = arith.mulf %236, %235 : vector<16x64xf32>
    %cst_123 = arith.constant 4.471500e-02 : f32
    %238 = vector.broadcast %cst_123 : f32 to vector<16x64xf32>
    %239 = arith.mulf %238, %235 : vector<16x64xf32>
    %240 = arith.mulf %239, %235 : vector<16x64xf32>
    %241 = arith.mulf %240, %235 : vector<16x64xf32>
    %242 = arith.addf %235, %241 : vector<16x64xf32>
    %cst_124 = arith.constant 0.797884583 : f32
    %243 = vector.broadcast %cst_124 : f32 to vector<16x64xf32>
    %244 = arith.mulf %243, %242 : vector<16x64xf32>
    %245 = math.tanh %244 : vector<16x64xf32>
    %cst_125 = arith.constant 1.000000e+00 : f32
    %246 = vector.broadcast %cst_125 : f32 to vector<16x64xf32>
    %247 = arith.addf %246, %245 : vector<16x64xf32>
    %248 = arith.mulf %237, %247 : vector<16x64xf32>
    %c1_126 = arith.constant 1 : index
    %c0_127 = arith.constant 0 : index
    %c0_128 = arith.constant 0 : index
    %249 = vector.load %arg20[%c1_126, %c0_127, %c0_128] : memref<2x64x32xbf16, #tpu.memory_space<vmem>>, vector<1x64x32xbf16>
    %250 = vector.shape_cast %249 : vector<1x64x32xbf16> to vector<64x32xbf16>
    %251 = arith.truncf %248 : vector<16x64xf32> to vector<16x64xbf16>
    %cst_129 = arith.constant dense<0.000000e+00> : vector<16x32xf32>
    %252 = tpu.matmul %251, %250, %cst_129 {dimension_numbers = #tpu.dot_dimension_numbers<[1], [0], [0], [1], [0, 0, 1, 1], [], []>} : vector<16x64xbf16>, vector<64x32xbf16>, vector<16x32xf32> -> vector<16x32xf32>
    %c1_130 = arith.constant 1 : index
    %c0_131 = arith.constant 0 : index
    %c0_132 = arith.constant 0 : index
    %253 = vector.load %arg21[%c1_130, %c0_131, %c0_132] : memref<2x1x32xf32, #tpu.memory_space<vmem>>, vector<1x1x32xf32>
    %254 = vector.shape_cast %253 : vector<1x1x32xf32> to vector<1x32xf32>
    %255 = vector.broadcast %254 : vector<1x32xf32> to vector<16x32xf32>
    %256 = arith.addf %252, %255 : vector<16x32xf32>
    %257 = arith.addf %227, %256 : vector<16x32xf32>
    %c1_133 = arith.constant 1 : index
    %c0_134 = arith.constant 0 : index
    %c0_135 = arith.constant 0 : index
    %258 = vector.load %arg22[%c1_133, %c0_134, %c0_135] : memref<2x1x32xf32, #tpu.memory_space<vmem>>, vector<1x1x32xf32>
    %259 = vector.shape_cast %258 : vector<1x1x32xf32> to vector<1x32xf32>
    %c1_136 = arith.constant 1 : index
    %c0_137 = arith.constant 0 : index
    %c0_138 = arith.constant 0 : index
    %260 = vector.load %arg23[%c1_136, %c0_137, %c0_138] : memref<2x1x32xf32, #tpu.memory_space<vmem>>, vector<1x1x32xf32>
    %261 = vector.shape_cast %260 : vector<1x1x32xf32> to vector<1x32xf32>
    %cst_139 = arith.constant dense<0.000000e+00> : vector<16xf32>
    %262 = vector.multi_reduction <add>, %257, %cst_139 [1] : vector<16x32xf32> to vector<16xf32>
    %263 = vector.shape_cast %262 : vector<16xf32> to vector<16x1xf32>
    %cst_140 = arith.constant 3.200000e+01 : f32
    %264 = vector.broadcast %cst_140 : f32 to vector<16x1xf32>
    %265 = arith.divf %263, %264 : vector<16x1xf32>
    %266 = arith.mulf %257, %257 : vector<16x32xf32>
    %cst_141 = arith.constant dense<0.000000e+00> : vector<16xf32>
    %267 = vector.multi_reduction <add>, %266, %cst_141 [1] : vector<16x32xf32> to vector<16xf32>
    %268 = vector.shape_cast %267 : vector<16xf32> to vector<16x1xf32>
    %cst_142 = arith.constant 3.200000e+01 : f32
    %269 = vector.broadcast %cst_142 : f32 to vector<16x1xf32>
    %270 = arith.divf %268, %269 : vector<16x1xf32>
    %271 = arith.mulf %265, %265 : vector<16x1xf32>
    %272 = arith.subf %270, %271 : vector<16x1xf32>
    %273 = vector.broadcast %265 : vector<16x1xf32> to vector<16x32xf32>
    %274 = arith.subf %257, %273 : vector<16x32xf32>
    %cst_143 = arith.constant 9.99999996E-13 : f32
    %275 = vector.broadcast %cst_143 : f32 to vector<16x1xf32>
    %276 = arith.addf %272, %275 : vector<16x1xf32>
    %277 = math.rsqrt %276 : vector<16x1xf32>
    %278 = vector.broadcast %277 : vector<16x1xf32> to vector<16x32xf32>
    %279 = arith.mulf %274, %278 : vector<16x32xf32>
    %280 = vector.broadcast %259 : vector<1x32xf32> to vector<16x32xf32>
    %281 = arith.mulf %279, %280 : vector<16x32xf32>
    %282 = vector.broadcast %261 : vector<1x32xf32> to vector<16x32xf32>
    %283 = arith.addf %281, %282 : vector<16x32xf32>
    %c0_144 = arith.constant 0 : index
    %c0_145 = arith.constant 0 : index
    %284 = vector.load %arg11[%c0_144, %c0_145] : memref<8x16xbf16, #tpu.memory_space<vmem>>, vector<8x16xbf16>
    %285 = arith.truncf %283 : vector<16x32xf32> to vector<16x32xbf16>
    %cst_146 = arith.constant dense<0.000000e+00> : vector<8x32xf32>
    %286 = tpu.matmul %284, %285, %cst_146 {dimension_numbers = #tpu.dot_dimension_numbers<[1], [0], [0], [1], [0, 0, 1, 1], [], []>} : vector<8x16xbf16>, vector<16x32xbf16>, vector<8x32xf32> -> vector<8x32xf32>
    %c0_147 = arith.constant 0 : index
    %c0_148 = arith.constant 0 : index
    %287 = vector.load %arg24[%c0_147, %c0_148] : memref<32x128xbf16, #tpu.memory_space<vmem>>, vector<32x128xbf16>
    %288 = arith.truncf %286 : vector<8x32xf32> to vector<8x32xbf16>
    %cst_149 = arith.constant dense<0.000000e+00> : vector<8x128xf32>
    %289 = tpu.matmul %288, %287, %cst_149 {dimension_numbers = #tpu.dot_dimension_numbers<[1], [0], [0], [1], [0, 0, 1, 1], [], []>} : vector<8x32xbf16>, vector<32x128xbf16>, vector<8x128xf32> -> vector<8x128xf32>
    %c0_150 = arith.constant 0 : index
    %c0_151 = arith.constant 0 : index
    %290 = vector.load %arg25[%c0_150, %c0_151] : memref<1x128xf32, #tpu.memory_space<vmem>>, vector<1x128xf32>
    %291 = vector.broadcast %290 : vector<1x128xf32> to vector<8x128xf32>
    %292 = arith.addf %289, %291 : vector<8x128xf32>
    %293 = tpu.iota {dimensions = array<i32: 1>} : vector<8x128xi32>
    %294 = tpu.iota {dimensions = array<i32: 0>} : vector<8x128xi32>
    %c13_i32 = arith.constant 13 : i32
    %295 = vector.broadcast %c13_i32 : i32 to vector<8x128xi32>
    %296 = arith.cmpi slt, %293, %295 : vector<8x128xi32>
    %cst_152 = arith.constant -1.000000e+30 : f32
    %297 = vector.broadcast %cst_152 : f32 to vector<8x128xf32>
    %298 = arith.select %296, %292, %297 : vector<8x128xi1>, vector<8x128xf32>
    %cst_153 = arith.constant dense<0xFF800000> : vector<8xf32>
    %299 = vector.multi_reduction <maximumf>, %298, %cst_153 [1] : vector<8x128xf32> to vector<8xf32>
    %300 = vector.shape_cast %299 : vector<8xf32> to vector<8x1xf32>
    %301 = vector.broadcast %300 : vector<8x1xf32> to vector<8x128xf32>
    %302 = arith.subf %298, %301 : vector<8x128xf32>
    %303 = math.exp %302 : vector<8x128xf32>
    %cst_154 = arith.constant dense<0.000000e+00> : vector<8xf32>
    %304 = vector.multi_reduction <add>, %303, %cst_154 [1] : vector<8x128xf32> to vector<8xf32>
    %305 = vector.shape_cast %304 : vector<8xf32> to vector<8x1xf32>
    %306 = math.log %305 : vector<8x1xf32>
    %307 = arith.addf %300, %306 : vector<8x1xf32>
    %c0_155 = arith.constant 0 : index
    %c0_156 = arith.constant 0 : index
    %308 = vector.load %arg1[%c0_155, %c0_156] : memref<8x1xi32, #tpu.memory_space<vmem>>, vector<8x1xi32>
    %309 = vector.broadcast %308 : vector<8x1xi32> to vector<8x128xi32>
    %310 = arith.cmpi eq, %293, %309 : vector<8x128xi32>
    %cst_157 = arith.constant 0.000000e+00 : f32
    %311 = vector.broadcast %cst_157 : f32 to vector<8x128xf32>
    %312 = arith.select %310, %292, %311 : vector<8x128xi1>, vector<8x128xf32>
    %cst_158 = arith.constant dense<0.000000e+00> : vector<8xf32>
    %313 = vector.multi_reduction <add>, %312, %cst_158 [1] : vector<8x128xf32> to vector<8xf32>
    %314 = vector.shape_cast %313 : vector<8xf32> to vector<8x1xf32>
    %315 = tpu.iota {dimensions = array<i32: 0>} : vector<8x1xi32>
    %c2_i32 = arith.constant 2 : i32
    %316 = vector.broadcast %c2_i32 : i32 to vector<8x1xi32>
    %317 = arith.cmpi slt, %315, %316 : vector<8x1xi32>
    %318 = arith.subf %307, %314 : vector<8x1xf32>
    %cst_159 = arith.constant 0.000000e+00 : f32
    %319 = vector.broadcast %cst_159 : f32 to vector<8x1xf32>
    %320 = arith.select %317, %318, %319 : vector<8x1xi1>, vector<8x1xf32>
    %cst_160 = arith.constant dense<0.000000e+00> : vector<1xf32>
    %321 = vector.multi_reduction <add>, %320, %cst_160 [0] : vector<8x1xf32> to vector<1xf32>
    %322 = vector.shape_cast %321 : vector<1xf32> to vector<1x1xf32>
    %cst_161 = arith.constant 5.000000e-01 : f32
    %323 = vector.broadcast %cst_161 : f32 to vector<1x1xf32>
    %324 = arith.mulf %322, %323 : vector<1x1xf32>
    %c7_i32 = arith.constant 7 : i32
    %325 = vector.broadcast %c7_i32 : i32 to vector<8x128xi32>
    %326 = arith.cmpi eq, %294, %325 : vector<8x128xi32>
    %327 = vector.shape_cast %324 : vector<1x1xf32> to vector<1x1xf32>
    %328 = vector.broadcast %327 : vector<1x1xf32> to vector<8x128xf32>
    %329 = arith.select %326, %328, %292 : vector<8x128xi1>, vector<8x128xf32>
    %c0_162 = arith.constant 0 : index
    %c0_163 = arith.constant 0 : index
    %330 = vector.load %arg26[%c0_162, %c0_163] : memref<8x128xf32, #tpu.memory_space<vmem>>, vector<8x128xf32>
    tpu.vector_store %arg26[%c0_162, %c0_163], %329 {strides = array<i32>} : memref<8x128xf32, #tpu.memory_space<vmem>>, vector<8x128xf32>,
    return
  }
}

</mosaic_0001>

<llo_original>
// kernel: eq.40
$region0: #{eq.40}
  %s0 = inlined_call_operand.vmem [shape: s32[4,16], index: 0, kind: input, shape index: {}]
  %s1 = inlined_call_operand.vmem [shape: s32[64], index: 1, kind: output, shape index: {}]
  $region1: #{eq.40} parent=0
    #allocation0 [shape = 'u8[4096]{0}', space=vmem, size = 0x1000, scoped, tag = 'scoped mem for output reshape']
    #allocation1 [shape = 'u8[4096]{0}', space=vmem, size = 0x1000, scoped, tag = 'scoped mem for input reshape']
    %s3 = sshllo.u32 0, 4
    %v4 = vld [vmem:[%s0] sm:%s3]
    %5 = vst [vmem:[#allocation1] sm:%s3] %v4
    %v6 = vld [vmem:[#allocation1] sm:$0x1]
    %vm7 = vcmask 130048
    %8 = vst.msk [vmem:[#allocation0] sm:$0x1] %vm7, %v6
    %s9 = scalar_lea.vmem [#allocation1], 3
    %v10 = vld [vmem:[%s9] sm:$0x1]
    %11 = vrot.lane.b32.xlu0 %v10, 48
    %v12 = vpop.permute.xlu0 %11
    %vm13 = vcmask 523648
    %14 = vst.msk [vmem:[#allocation0] sm:$0x1] %vm13, %v12
    %s15 = scalar_lea.vmem [#allocation1], 2
    %v16 = vld [vmem:[%s15] sm:$0x1]
    %17 = vrot.lane.b32.xlu0 %v16, 32
    %v18 = vpop.permute.xlu0 %17
    %vm19 = vcmask 392448
    %20 = vst.msk [vmem:[#allocation0] sm:$0x1] %vm19, %v18
    %s21 = scalar_lea.vmem [#allocation1], 1
    %v22 = vld [vmem:[%s21] sm:$0x1]
    %23 = vrot.lane.b32.xlu0 %v22, 16
    %v24 = vpop.permute.xlu0 %23
    %vm25 = vcmask 261248
    %26 = vst.msk [vmem:[#allocation0] sm:$0x1] %vm25, %v24
    %s28 = sshllo.u32 0, 1
    %v30 = vld [vmem:[#allocation0] sm:%s28]
    %s31 = sshllo.u32 0, 1
    %32 = vst [vmem:[%s1] sm:%s31] %v30

// kernel: bert_edarc_erc_forward.1
$region0: #{bert_edarc_erc_forward.1}
  #allocation0 [shape = 'u32[]', space=smem, size = 0x4, offset = 0x4, fixed_abs, tag = 'smem constant byte address 0x4 - core index']
  #allocation1 [shape = 'u32[144,128]{1,0:T(1,128)}', space=vmem, size = 0x12000, scoped, tag = 'internal scratch']
  %s0 = inlined_call_operand.vmem [shape: s32[16,1], index: 0, kind: input, shape index: {}]
  %s1 = inlined_call_operand.vmem [shape: s32[8,1], index: 1, kind: input, shape index: {}]
  %s2 = inlined_call_operand.vmem [shape: bf16[50,32], index: 2, kind: input, shape index: {}]
  %s3 = inlined_call_operand.vmem [shape: f32[16,32], index: 3, kind: input, shape index: {}]
  %s4 = inlined_call_operand.vmem [shape: f32[1,32], index: 4, kind: input, shape index: {}]
  %s5 = inlined_call_operand.vmem [shape: f32[1,32], index: 5, kind: input, shape index: {}]
  %s6 = inlined_call_operand.vmem [shape: f32[64,16], index: 6, kind: input, shape index: {}]
  %s7 = inlined_call_operand.vmem [shape: f32[64,128], index: 7, kind: input, shape index: {}]
  %s8 = inlined_call_operand.vmem [shape: f32[64,128], index: 8, kind: input, shape index: {}]
  %s9 = inlined_call_operand.vmem [shape: bf16[64,16], index: 9, kind: input, shape index: {}]
  %s10 = inlined_call_operand.vmem [shape: bf16[16,64], index: 10, kind: input, shape index: {}]
  %s11 = inlined_call_operand.vmem [shape: bf16[8,16], index: 11, kind: input, shape index: {}]
  %s12 = inlined_call_operand.vmem [shape: bf16[2,32,128], index: 12, kind: input, shape index: {}]
  %s13 = inlined_call_operand.vmem [shape: f32[2,1,128], index: 13, kind: input, shape index: {}]
  %s14 = inlined_call_operand.vmem [shape: bf16[2,128,32], index: 14, kind: input, shape index: {}]
  %s15 = inlined_call_operand.vmem [shape: f32[2,1,32], index: 15, kind: input, shape index: {}]
  %s16 = inlined_call_operand.vmem [shape: f32[2,1,32], index: 16, kind: input, shape index: {}]
  %s17 = inlined_call_operand.vmem [shape: f32[2,1,32], index: 17, kind: input, shape index: {}]
  %s18 = inlined_call_operand.vmem [shape: bf16[2,32,64], index: 18, kind: input, shape index: {}]
  %s19 = inlined_call_operand.vmem [shape: f32[2,1,64], index: 19, kind: input, shape index: {}]
  %s20 = inlined_call_operand.vmem [shape: bf16[2,64,32], index: 20, kind: input, shape index: {}]
  %s21 = inlined_call_operand.vmem [shape: f32[2,1,32], index: 21, kind: input, shape index: {}]
  %s22 = inlined_call_operand.vmem [shape: f32[2,1,32], index: 22, kind: input, shape index: {}]
  %s23 = inlined_call_operand.vmem [shape: f32[2,1,32], index: 23, kind: input, shape index: {}]
  %s24 = inlined_call_operand.vmem [shape: bf16[32,128], index: 24, kind: input, shape index: {}]
  %s25 = inlined_call_operand.vmem [shape: f32[1,128], index: 25, kind: input, shape index: {}]
  %s26 = inlined_call_operand.vmem [shape: f32[8,128], index: 26, kind: output, shape index: {}]
  %s27 = sld [smem:[#allocation0]]
  $region114: #{bert_edarc_erc_forward.1} parent=0
    _
  %s29 = ssub.s32 1, %s27
  %s30 = scalar_select 0, %s29, %s27
  // Predicated region
  $region2: #{bert_edarc_erc_forward.1} parent=0 // pred_check
    _
  $region3: #{bert_edarc_erc_forward.1} parent=0 // pred_check_branch
    %32 = sbr.rel (0) target = $region5
  $region4: #{bert_edarc_erc_forward.1} parent=0 // pred_region
    _
  $region5: #{bert_edarc_erc_forward.1} parent=0 // pred_fallthru
    _
  // Predicated region
  $region6: #{bert_edarc_erc_forward.1} parent=0 // pred_check
    _
  $region7: #{bert_edarc_erc_forward.1} parent=0 // pred_check_branch
    %34 = sbr.rel (0) target = $region9
  $region8: #{bert_edarc_erc_forward.1} parent=0 // pred_region
    _
  $region9: #{bert_edarc_erc_forward.1} parent=0 // pred_fallthru
    _
  // Predicated region
  $region10: #{bert_edarc_erc_forward.1} parent=0 // pred_check
    _
  $region11: #{bert_edarc_erc_forward.1} parent=0 // pred_check_branch
    %36 = sbr.rel (0) target = $region13
  $region12: #{bert_edarc_erc_forward.1} parent=0 // pred_region
    _
  $region13: #{bert_edarc_erc_forward.1} parent=0 // pred_fallthru
    _
  // Predicated region
  $region14: #{bert_edarc_erc_forward.1} parent=0 // pred_check
    _
  $region15: #{bert_edarc_erc_forward.1} parent=0 // pred_check_branch
    %38 = sbr.rel (0) target = $region17
  $region16: #{bert_edarc_erc_forward.1} parent=0 // pred_region
    _
  $region17: #{bert_edarc_erc_forward.1} parent=0 // pred_fallthru
    _
  // Predicated region
  $region18: #{bert_edarc_erc_forward.1} parent=0 // pred_check
    _
  $region19: #{bert_edarc_erc_forward.1} parent=0 // pred_check_branch
    %40 = sbr.rel (0) target = $region21
  $region20: #{bert_edarc_erc_forward.1} parent=0 // pred_region
    _
  $region21: #{bert_edarc_erc_forward.1} parent=0 // pred_fallthru
    _
  // Predicated region
  $region22: #{bert_edarc_erc_forward.1} parent=0 // pred_check
    _
  $region23: #{bert_edarc_erc_forward.1} parent=0 // pred_check_branch
    %42 = sbr.rel (0) target = $region25
  $region24: #{bert_edarc_erc_forward.1} parent=0 // pred_region
    _
  $region25: #{bert_edarc_erc_forward.1} parent=0 // pred_fallthru
    _
  // Predicated region
  $region26: #{bert_edarc_erc_forward.1} parent=0 // pred_check
    _
  $region27: #{bert_edarc_erc_forward.1} parent=0 // pred_check_branch
    %44 = sbr.rel (0) target = $region29
  $region28: #{bert_edarc_erc_forward.1} parent=0 // pred_region
    _
  $region29: #{bert_edarc_erc_forward.1} parent=0 // pred_fallthru
    _
  // Predicated region
  $region30: #{bert_edarc_erc_forward.1} parent=0 // pred_check
    _
  $region31: #{bert_edarc_erc_forward.1} parent=0 // pred_check_branch
    %46 = sbr.rel (0) target = $region33
  $region32: #{bert_edarc_erc_forward.1} parent=0 // pred_region
    _
  $region33: #{bert_edarc_erc_forward.1} parent=0 // pred_fallthru
    _
  // Predicated region
  $region34: #{bert_edarc_erc_forward.1} parent=0 // pred_check
    _
  $region35: #{bert_edarc_erc_forward.1} parent=0 // pred_check_branch
    %48 = sbr.rel (0) target = $region37
  $region36: #{bert_edarc_erc_forward.1} parent=0 // pred_region
    _
  $region37: #{bert_edarc_erc_forward.1} parent=0 // pred_fallthru
    _
  // Predicated region
  $region38: #{bert_edarc_erc_forward.1} parent=0 // pred_check
    _
  $region39: #{bert_edarc_erc_forward.1} parent=0 // pred_check_branch
    %50 = sbr.rel (0) target = $region41
  $region40: #{bert_edarc_erc_forward.1} parent=0 // pred_region
    _
  $region41: #{bert_edarc_erc_forward.1} parent=0 // pred_fallthru
    _
  // Predicated region
  $region42: #{bert_edarc_erc_forward.1} parent=0 // pred_check
    _
  $region43: #{bert_edarc_erc_forward.1} parent=0 // pred_check_branch
    %52 = sbr.rel (0) target = $region45
  $region44: #{bert_edarc_erc_forward.1} parent=0 // pred_region
    _
  $region45: #{bert_edarc_erc_forward.1} parent=0 // pred_fallthru
    _
  // Predicated region
  $region46: #{bert_edarc_erc_forward.1} parent=0 // pred_check
    _
  $region47: #{bert_edarc_erc_forward.1} parent=0 // pred_check_branch
    %54 = sbr.rel (0) target = $region49
  $region48: #{bert_edarc_erc_forward.1} parent=0 // pred_region
    _
  $region49: #{bert_edarc_erc_forward.1} parent=0 // pred_fallthru
    _
  // Predicated region
  $region50: #{bert_edarc_erc_forward.1} parent=0 // pred_check
    _
  $region51: #{bert_edarc_erc_forward.1} parent=0 // pred_check_branch
    %56 = sbr.rel (0) target = $region53
  $region52: #{bert_edarc_erc_forward.1} parent=0 // pred_region
    _
  $region53: #{bert_edarc_erc_forward.1} parent=0 // pred_fallthru
    _
  // Predicated region
  $region54: #{bert_edarc_erc_forward.1} parent=0 // pred_check
    _
  $region55: #{bert_edarc_erc_forward.1} parent=0 // pred_check_branch
    %58 = sbr.rel (0) target = $region57
  $region56: #{bert_edarc_erc_forward.1} parent=0 // pred_region
    _
  $region57: #{bert_edarc_erc_forward.1} parent=0 // pred_fallthru
    _
  // Predicated region
  $region58: #{bert_edarc_erc_forward.1} parent=0 // pred_check
    _
  $region59: #{bert_edarc_erc_forward.1} parent=0 // pred_check_branch
    %60 = sbr.rel (0) target = $region61
  $region60: #{bert_edarc_erc_forward.1} parent=0 // pred_region
    _
  $region61: #{bert_edarc_erc_forward.1} parent=0 // pred_fallthru
    _
  // Predicated region
  $region62: #{bert_edarc_erc_forward.1} parent=0 // pred_check
    _
  $region63: #{bert_edarc_erc_forward.1} parent=0 // pred_check_branch
    %62 = sbr.rel (0) target = $region65
  $region64: #{bert_edarc_erc_forward.1} parent=0 // pred_region
    _
  $region65: #{bert_edarc_erc_forward.1} parent=0 // pred_fallthru
    _
  // Predicated region
  $region66: #{bert_edarc_erc_forward.1} parent=0 // pred_check
    _
  $region67: #{bert_edarc_erc_forward.1} parent=0 // pred_check_branch
    %64 = sbr.rel (0) target = $region69
  $region68: #{bert_edarc_erc_forward.1} parent=0 // pred_region
    _
  $region69: #{bert_edarc_erc_forward.1} parent=0 // pred_fallthru
    _
  // Predicated region
  $region70: #{bert_edarc_erc_forward.1} parent=0 // pred_check
    _
  $region71: #{bert_edarc_erc_forward.1} parent=0 // pred_check_branch
    %66 = sbr.rel (0) target = $region73
  $region72: #{bert_edarc_erc_forward.1} parent=0 // pred_region
    _
  $region73: #{bert_edarc_erc_forward.1} parent=0 // pred_fallthru
    _
  // Predicated region
  $region74: #{bert_edarc_erc_forward.1} parent=0 // pred_check
    _
  $region75: #{bert_edarc_erc_forward.1} parent=0 // pred_check_branch
    %68 = sbr.rel (0) target = $region77
  $region76: #{bert_edarc_erc_forward.1} parent=0 // pred_region
    _
  $region77: #{bert_edarc_erc_forward.1} parent=0 // pred_fallthru
    _
  // Predicated region
  $region78: #{bert_edarc_erc_forward.1} parent=0 // pred_check
    _
  $region79: #{bert_edarc_erc_forward.1} parent=0 // pred_check_branch
    %70 = sbr.rel (0) target = $region81
  $region80: #{bert_edarc_erc_forward.1} parent=0 // pred_region
    _
  $region81: #{bert_edarc_erc_forward.1} parent=0 // pred_fallthru
    _
  // Predicated region
  $region82: #{bert_edarc_erc_forward.1} parent=0 // pred_check
    _
  $region83: #{bert_edarc_erc_forward.1} parent=0 // pred_check_branch
    %72 = sbr.rel (0) target = $region85
  $region84: #{bert_edarc_erc_forward.1} parent=0 // pred_region
    _
  $region85: #{bert_edarc_erc_forward.1} parent=0 // pred_fallthru
    _
  // Predicated region
  $region86: #{bert_edarc_erc_forward.1} parent=0 // pred_check
    _
  $region87: #{bert_edarc_erc_forward.1} parent=0 // pred_check_branch
    %74 = sbr.rel (0) target = $region89
  $region88: #{bert_edarc_erc_forward.1} parent=0 // pred_region
    _
  $region89: #{bert_edarc_erc_forward.1} parent=0 // pred_fallthru
    _
  // Predicated region
  $region90: #{bert_edarc_erc_forward.1} parent=0 // pred_check
    _
  $region91: #{bert_edarc_erc_forward.1} parent=0 // pred_check_branch
    %76 = sbr.rel (0) target = $region93
  $region92: #{bert_edarc_erc_forward.1} parent=0 // pred_region
    _
  $region93: #{bert_edarc_erc_forward.1} parent=0 // pred_fallthru
    _
  // Predicated region
  $region94: #{bert_edarc_erc_forward.1} parent=0 // pred_check
    _
  $region95: #{bert_edarc_erc_forward.1} parent=0 // pred_check_branch
    %78 = sbr.rel (0) target = $region97
  $region96: #{bert_edarc_erc_forward.1} parent=0 // pred_region
    _
  $region97: #{bert_edarc_erc_forward.1} parent=0 // pred_fallthru
    _
  // Predicated region
  $region98: #{bert_edarc_erc_forward.1} parent=0 // pred_check
    _
  $region99: #{bert_edarc_erc_forward.1} parent=0 // pred_check_branch
    %80 = sbr.rel (0) target = $region101
  $region100: #{bert_edarc_erc_forward.1} parent=0 // pred_region
    _
  $region101: #{bert_edarc_erc_forward.1} parent=0 // pred_fallthru
    _
  // Predicated region
  $region102: #{bert_edarc_erc_forward.1} parent=0 // pred_check
    _
  $region103: #{bert_edarc_erc_forward.1} parent=0 // pred_check_branch
    %82 = sbr.rel (0) target = $region105
  $region104: #{bert_edarc_erc_forward.1} parent=0 // pred_region
    _
  $region105: #{bert_edarc_erc_forward.1} parent=0 // pred_fallthru
    _
  %v84 = vlaneseq
  %v85 = vand.u32 %v84, 127
  %v86 = vld [vmem:[%s0] sm:$0xff]
  %v87 = vld [vmem:[%s0 + $0x8] sm:$0xff]
  %88 = vset.pattern.permute.xlu0 0
  %89 = vperm.xlu0 %88, %v86
  %v90 = vpop.permute.xlu0 %89
  %91 = vset.pattern.permute.xlu0 0
  %92 = vperm.xlu0 %91, %v87
  %v93 = vpop.permute.xlu0 %92
  %vm94 = vcmp.eq.s32.totalorder %v85, %v90
  %vm95 = vcmp.eq.s32.totalorder %v85, %v93
  %v96 = vsel %vm94, 1, 0
  %v97 = vsel %vm95, 1, 0
  %v98 = vcvt.s32.f32 %v96
  %v99 = vcvt.s32.f32 %v97
  %v100 = vpack.c.bf16 %v99, %v98
  %v101 = vld [vmem:[%s2] sm:$0xf]
  %v102 = vld [vmem:[%s2 + $0x4] sm:$0xf]
  %v103 = vld [vmem:[%s2 + $0x8] sm:$0xf]
  %v104 = vld [vmem:[%s2 + $0xc] sm:$0xf]
  %v105 = vld [vmem:[%s2 + $0x10] sm:$0xf]
  %v106 = vld [vmem:[%s2 + $0x14] sm:$0xf]
  %v107 = vld [vmem:[%s2 + $0x18] sm:$0x1]
  %v108 = vld [vmem:[%s3] sm:$0xff]
  %v109 = vld [vmem:[%s3 + $0x8] sm:$0xff]
  %v117 = vunpack.c.l.b16 %v101
  %v118 = vunpack.c.l.b16 %v102
  %v119 = vunpack.c.l.b16 %v103
  %v120 = vunpack.c.l.b16 %v104
  %v121 = vunpack.c.l.b16 %v105
  %v122 = vunpack.c.l.b16 %v106
  %v123 = vunpack.c.l.b16 %v107
  %v124 = vpack.c.b16 %v118, %v117
  %v125 = vpack.c.b16 %v120, %v119
  %v126 = vpack.c.b16 %v122, %v121
  %v127 = vpack.c.b16 %v123, %v123
  %vm131 = vcmask 408576
  %v133 = vsel %vm131, %v100, 0
  %vm135 = vcmask 1040384
  %v137 = vsel %vm135, %v127, 0
  %139 = vmatprep.subr.bf16.mxu0 0
  %140 = vmatpush1.bf16.msra.mxu0 %v124
  %141 = vmatprep.subr.bf16.mxu0 0
  %142 = vmatpush1.bf16.msra.mxu0 %v125
  %143 = vmatprep.subr.bf16.mxu0 0
  %144 = vmatpush1.bf16.msra.mxu0 %v126
  %145 = vmatprep.subr.bf16.mxu0 0
  %146 = vmatpush1.bf16.msra.mxu0 %v137
  %147 = vmatprep.subr.bf16.mxu0 0
  %148 = vmatpush1.bf16.msra.mxu0 0
  %149 = vmatprep.subr.bf16.mxu0 0
  %150 = vmatpush1.bf16.msra.mxu0 0
  %151 = vmatprep.subr.bf16.mxu0 0
  %152 = vmatpush1.bf16.msra.mxu0 0
  %153 = vmatprep.subr.bf16.mxu0 0
  %154 = vmatpush1.bf16.msra.mxu0 0
  %155 = vmatprep.subr.bf16.mxu0 0
  %156 = vmatpush1.bf16.msra.mxu0 0
  %157 = vmatprep.subr.bf16.mxu0 0
  %158 = vmatpush1.bf16.msra.mxu0 0
  %159 = vmatprep.subr.bf16.mxu0 0
  %160 = vmatpush1.bf16.msra.mxu0 0
  %161 = vmatprep.subr.bf16.mxu0 0
  %162 = vmatpush1.bf16.msra.mxu0 0
  %163 = vmatprep.subr.bf16.mxu0 0
  %164 = vmatpush1.bf16.msra.mxu0 0
  %165 = vmatprep.subr.bf16.mxu0 0
  %166 = vmatpush1.bf16.msra.mxu0 0
  %167 = vmatprep.subr.bf16.mxu0 0
  %168 = vmatpush1.bf16.msra.mxu0 0
  %169 = vmatprep.subr.bf16.mxu0 0
  %170 = vmatpush1.bf16.msra.mxu0 0
  %171 = vmatprep.mubr.bf16.mxu0 0
  %172 = vmatmul.mubr.bf16.gmra.mrb[0].mxu0 %v133
  %v173 = vpop.f32.mrb[0].mxu0
  %v174 = vadd.f32 %v108, %v173
  %v175 = vpop.f32.mrb[0].mxu0
  %v176 = vpop.f32.mrb[0].mxu0
  %v177 = vadd.f32 %v109, %v176
  %v178 = vpop.f32.mrb[0].mxu0
  %179 = vdwg.mxu0
  %v180 = vld [vmem:[%s4] sm:$0x1]
  %v181 = vld [vmem:[%s5] sm:$0x1]
  %vm182 = vcmask 261120
  %v183 = vsel %vm182, %v174, 0.0
  %184 = vadd.xlane.f32.xlu0 %v183
  %v185 = vpop.xlane.xlu0 %184
  %v186 = vsel %vm182, %v177, 0.0
  %187 = vadd.xlane.f32.xlu0 %v186
  %v188 = vpop.xlane.xlu0 %187
  %v189 = vrcp.pop 32.0
  %v190 = vmul.f32 %v185, %v189
  %v191 = vmul.f32 %v188, %v189
  %v192 = vmul.f32 %v174, %v174
  %v193 = vmul.f32 %v177, %v177
  %v194 = vsel %vm182, %v192, 0.0
  %195 = vadd.xlane.f32.xlu0 %v194
  %v196 = vpop.xlane.xlu0 %195
  %v197 = vsel %vm182, %v193, 0.0
  %198 = vadd.xlane.f32.xlu0 %v197
  %v199 = vpop.xlane.xlu0 %198
  %v200 = vmul.f32 %v196, %v189
  %v201 = vmul.f32 %v199, %v189
  %v202 = vmul.f32 %v190, %v190
  %v203 = vmul.f32 %v191, %v191
  %v204 = vsub.f32 %v200, %v202
  %v205 = vsub.f32 %v201, %v203
  %v206 = vsub.f32 %v174, %v190
  %v207 = vsub.f32 %v177, %v191
  %v208 = vadd.f32 %v204, 1e-12
  %v209 = vadd.f32 %v205, 1e-12
  %v210 = vrsqrt.pop %v208
  %v211 = vrsqrt.pop %v209
  %v212 = vmul.f32 %v206, %v210
  %v213 = vmul.f32 %v207, %v211
  %v215 = vlaneseq
  %v216 = vshrl.u32 %v215, 7
  %v217 = vsub.s32 0, %v216
  %v218 = vrot.slane %v180, %v217
  %v220 = vmul.f32 %v212, %v218
  %v221 = vmul.f32 %v213, %v218
  %v223 = vlaneseq
  %v224 = vshrl.u32 %v223, 7
  %v225 = vsub.s32 0, %v224
  %v226 = vrot.slane %v181, %v225
  %v228 = vadd.f32 %v220, %v226
  %v229 = vadd.f32 %v221, %v226
  %v230 = vld [vmem:[%s6] sm:$0xff]
  %v231 = vld [vmem:[%s6 + $0x8] sm:$0xff]
  %v232 = vld [vmem:[%s6 + $0x10] sm:$0xff]
  %v233 = vld [vmem:[%s6 + $0x18] sm:$0xff]
  %v234 = vld [vmem:[%s6 + $0x20] sm:$0xff]
  %v235 = vld [vmem:[%s6 + $0x28] sm:$0xff]
  %v236 = vld [vmem:[%s6 + $0x30] sm:$0xff]
  %v237 = vld [vmem:[%s6 + $0x38] sm:$0xff]
  %v238 = vld [vmem:[%s7] sm:$0xff]
  %v239 = vld [vmem:[%s7 + $0x8] sm:$0xff]
  %v240 = vld [vmem:[%s7 + $0x10] sm:$0xff]
  %v241 = vld [vmem:[%s7 + $0x18] sm:$0xff]
  %v242 = vld [vmem:[%s7 + $0x20] sm:$0xff]
  %v243 = vld [vmem:[%s7 + $0x28] sm:$0xff]
  %v244 = vld [vmem:[%s7 + $0x30] sm:$0xff]
  %v245 = vld [vmem:[%s7 + $0x38] sm:$0xff]
  %v246 = vld [vmem:[%s8] sm:$0xff]
  %v247 = vld [vmem:[%s8 + $0x8] sm:$0xff]
  %v248 = vld [vmem:[%s8 + $0x10] sm:$0xff]
  %v249 = vld [vmem:[%s8 + $0x18] sm:$0xff]
  %v250 = vld [vmem:[%s8 + $0x20] sm:$0xff]
  %v251 = vld [vmem:[%s8 + $0x28] sm:$0xff]
  %v252 = vld [vmem:[%s8 + $0x30] sm:$0xff]
  %v253 = vld [vmem:[%s8 + $0x38] sm:$0xff]
  %v254 = vld [vmem:[%s9] sm:$0xf]
  %v255 = vld [vmem:[%s9 + $0x4] sm:$0xf]
  %v256 = vld [vmem:[%s9 + $0x8] sm:$0xf]
  %v257 = vld [vmem:[%s9 + $0xc] sm:$0xf]
  %v258 = vld [vmem:[%s9 + $0x10] sm:$0xf]
  %v259 = vld [vmem:[%s9 + $0x14] sm:$0xf]
  %v260 = vld [vmem:[%s9 + $0x18] sm:$0xf]
  %v261 = vld [vmem:[%s9 + $0x1c] sm:$0xf]
  %v262 = vld [vmem:[%s10] sm:$0xf]
  %v263 = vld [vmem:[%s10 + $0x4] sm:$0xf]
  %v264 = vld [vmem:[%s12] sm:$0xf]
  %v265 = vld [vmem:[%s12 + $0x4] sm:$0xf]
  %v266 = vld [vmem:[%s12 + $0x8] sm:$0xf]
  %v267 = vld [vmem:[%s12 + $0xc] sm:$0xf]
  %v268 = vpack.c.bf16 %v229, %v228
  %v269 = vld [vmem:[%s13] sm:$0x1]
  %v271 = vlaneseq
  %v272 = vshrl.u32 %v271, 7
  %v273 = vsub.s32 0, %v272
  %v274 = vrot.slane %v269, %v273
  %v280 = vunpack.c.l.b16 %v264
  %v281 = vunpack.c.l.b16 %v265
  %v282 = vunpack.c.l.b16 %v266
  %v283 = vunpack.c.l.b16 %v267
  %v284 = vpack.c.b16 %v281, %v280
  %v285 = vpack.c.b16 %v283, %v282
  %v289 = vsel %vm182, %v268, 0
  %291 = vmatprep.subr.bf16.mxu0 0
  %292 = vmatpush1.bf16.msra.mxu0 %v284
  %293 = vmatprep.subr.bf16.mxu0 0
  %294 = vmatpush1.bf16.msra.mxu0 %v285
  %295 = vmatprep.subr.bf16.mxu0 0
  %296 = vmatpush1.bf16.msra.mxu0 0
  %297 = vmatprep.subr.bf16.mxu0 0
  %298 = vmatpush1.bf16.msra.mxu0 0
  %299 = vmatprep.subr.bf16.mxu0 0
  %300 = vmatpush1.bf16.msra.mxu0 0
  %301 = vmatprep.subr.bf16.mxu0 0
  %302 = vmatpush1.bf16.msra.mxu0 0
  %303 = vmatprep.subr.bf16.mxu0 0
  %304 = vmatpush1.bf16.msra.mxu0 0
  %305 = vmatprep.subr.bf16.mxu0 0
  %306 = vmatpush1.bf16.msra.mxu0 0
  %307 = vmatprep.subr.bf16.mxu0 0
  %308 = vmatpush1.bf16.msra.mxu0 0
  %309 = vmatprep.subr.bf16.mxu0 0
  %310 = vmatpush1.bf16.msra.mxu0 0
  %311 = vmatprep.subr.bf16.mxu0 0
  %312 = vmatpush1.bf16.msra.mxu0 0
  %313 = vmatprep.subr.bf16.mxu0 0
  %314 = vmatpush1.bf16.msra.mxu0 0
  %315 = vmatprep.subr.bf16.mxu0 0
  %316 = vmatpush1.bf16.msra.mxu0 0
  %317 = vmatprep.subr.bf16.mxu0 0
  %318 = vmatpush1.bf16.msra.mxu0 0
  %319 = vmatprep.subr.bf16.mxu0 0
  %320 = vmatpush1.bf16.msra.mxu0 0
  %321 = vmatprep.subr.bf16.mxu0 0
  %322 = vmatpush1.bf16.msra.mxu0 0
  %323 = vmatprep.mubr.bf16.mxu0 0
  %324 = vmatmul.mubr.bf16.gmra.mrb[0].mxu0 %v289
  %v325 = vpop.f32.mrb[0].mxu0
  %v326 = vadd.f32 %v274, %v325
  %v327 = vpop.f32.mrb[0].mxu0
  %v328 = vpop.f32.mrb[0].mxu0
  %v329 = vadd.f32 %v274, %v328
  %v330 = vpop.f32.mrb[0].mxu0
  %331 = vdwg.mxu0
  %v332 = vpack.c.bf16 %v329, %v326
  %v341 = vunpack.c.l.b16 %v254
  %v342 = vunpack.c.l.b16 %v255
  %v343 = vunpack.c.l.b16 %v256
  %v344 = vunpack.c.l.b16 %v257
  %v345 = vunpack.c.l.b16 %v258
  %v346 = vunpack.c.l.b16 %v259
  %v347 = vunpack.c.l.b16 %v260
  %v348 = vunpack.c.l.b16 %v261
  %v349 = vpack.c.b16 %v342, %v341
  %v350 = vpack.c.b16 %v344, %v343
  %v351 = vpack.c.b16 %v346, %v345
  %v352 = vpack.c.b16 %v348, %v347
  %vm353 = vcmask 130048
  %v355 = vsel %vm353, %v349, 0
  %v358 = vsel %vm353, %v350, 0
  %v361 = vsel %vm353, %v351, 0
  %v364 = vsel %vm353, %v352, 0
  %366 = vmatprep.subr.bf16.mxu0 0
  %367 = vmatpush1.bf16.msra.mxu0 %v332
  %368 = vmatprep.subr.bf16.mxu0 0
  %369 = vmatpush1.bf16.msra.mxu0 0
  %370 = vmatprep.subr.bf16.mxu0 0
  %371 = vmatpush1.bf16.msra.mxu0 0
  %372 = vmatprep.subr.bf16.mxu0 0
  %373 = vmatpush1.bf16.msra.mxu0 0
  %374 = vmatprep.subr.bf16.mxu0 0
  %375 = vmatpush1.bf16.msra.mxu0 0
  %376 = vmatprep.subr.bf16.mxu0 0
  %377 = vmatpush1.bf16.msra.mxu0 0
  %378 = vmatprep.subr.bf16.mxu0 0
  %379 = vmatpush1.bf16.msra.mxu0 0
  %380 = vmatprep.subr.bf16.mxu0 0
  %381 = vmatpush1.bf16.msra.mxu0 0
  %382 = vmatprep.subr.bf16.mxu0 0
  %383 = vmatpush1.bf16.msra.mxu0 0
  %384 = vmatprep.subr.bf16.mxu0 0
  %385 = vmatpush1.bf16.msra.mxu0 0
  %386 = vmatprep.subr.bf16.mxu0 0
  %387 = vmatpush1.bf16.msra.mxu0 0
  %388 = vmatprep.subr.bf16.mxu0 0
  %389 = vmatpush1.bf16.msra.mxu0 0
  %390 = vmatprep.subr.bf16.mxu0 0
  %391 = vmatpush1.bf16.msra.mxu0 0
  %392 = vmatprep.subr.bf16.mxu0 0
  %393 = vmatpush1.bf16.msra.mxu0 0
  %394 = vmatprep.subr.bf16.mxu0 0
  %395 = vmatpush1.bf16.msra.mxu0 0
  %396 = vmatprep.subr.bf16.mxu0 0
  %397 = vmatpush1.bf16.msra.mxu0 0
  %398 = vmatprep.mubr.bf16.mxu0 0
  %399 = vmatmul.mubr.bf16.gmra.mrb[0].mxu0 %v355
  %v400 = vpop.f32.mrb[0].mxu0
  %v401 = vadd.f32 0.0, %v400
  %v402 = vpop.f32.mrb[0].mxu0
  %v403 = vpop.f32.mrb[0].mxu0
  %v404 = vadd.f32 0.0, %v403
  %v405 = vpop.f32.mrb[0].mxu0
  %406 = vmatprep.mubr.bf16.mxu0 0
  %407 = vmatmul.mubr.bf16.gmra.mrb[0].mxu0 %v358
  %v408 = vpop.f32.mrb[0].mxu0
  %v409 = vadd.f32 0.0, %v408
  %v410 = vpop.f32.mrb[0].mxu0
  %v411 = vpop.f32.mrb[0].mxu0
  %v412 = vadd.f32 0.0, %v411
  %v413 = vpop.f32.mrb[0].mxu0
  %414 = vmatprep.mubr.bf16.mxu0 0
  %415 = vmatmul.mubr.bf16.gmra.mrb[0].mxu0 %v361
  %v416 = vpop.f32.mrb[0].mxu0
  %v417 = vadd.f32 0.0, %v416
  %v418 = vpop.f32.mrb[0].mxu0
  %v419 = vpop.f32.mrb[0].mxu0
  %v420 = vadd.f32 0.0, %v419
  %v421 = vpop.f32.mrb[0].mxu0
  %422 = vmatprep.mubr.bf16.mxu0 0
  %423 = vmatmul.mubr.bf16.gmra.mrb[0].mxu0 %v364
  %v424 = vpop.f32.mrb[0].mxu0
  %v425 = vadd.f32 0.0, %v424
  %v426 = vpop.f32.mrb[0].mxu0
  %v427 = vpop.f32.mrb[0].mxu0
  %v428 = vadd.f32 0.0, %v427
  %v429 = vpop.f32.mrb[0].mxu0
  %430 = vdwg.mxu0
  %v431 = vmul.f32 %v401, %v238
  %v432 = vmul.f32 %v404, %v239
  %v433 = vmul.f32 %v409, %v240
  %v434 = vmul.f32 %v412, %v241
  %v435 = vmul.f32 %v417, %v242
  %v436 = vmul.f32 %v420, %v243
  %v437 = vmul.f32 %v425, %v244
  %v438 = vmul.f32 %v428, %v245
  %439 = vrot.lane.b32.xlu0 %v326, 64
  %v440 = vpop.permute.xlu0 %439
  %441 = vrot.lane.b32.xlu0 %v329, 64
  %v442 = vpop.permute.xlu0 %441
  %v443 = vpack.c.bf16 %v442, %v440
  %v444 = vpack.c.bf16 %v432, %v431
  %v445 = vpack.c.bf16 %v434, %v433
  %v446 = vpack.c.bf16 %v436, %v435
  %v447 = vpack.c.bf16 %v438, %v437
  %448 = vmatprep.subr.bf16.mxu0 0
  %449 = vmatpush1.bf16.xpose.msra.mxu0 %v443
  %450 = vmatprep.subr.bf16.mxu0 0
  %451 = vmatpush1.bf16.xpose.msra.mxu0 0
  %452 = vmatprep.subr.bf16.mxu0 0
  %453 = vmatpush1.bf16.xpose.msra.mxu0 0
  %454 = vmatprep.subr.bf16.mxu0 0
  %455 = vmatpush1.bf16.xpose.msra.mxu0 0
  %456 = vmatprep.subr.bf16.mxu0 0
  %457 = vmatpush1.bf16.xpose.msra.mxu0 0
  %458 = vmatprep.subr.bf16.mxu0 0
  %459 = vmatpush1.bf16.xpose.msra.mxu0 0
  %460 = vmatprep.subr.bf16.mxu0 0
  %461 = vmatpush1.bf16.xpose.msra.mxu0 0
  %462 = vmatprep.subr.bf16.mxu0 0
  %463 = vmatpush1.bf16.xpose.msra.mxu0 0
  %464 = vmatprep.subr.bf16.mxu0 0
  %465 = vmatpush1.bf16.xpose.msra.mxu0 0
  %466 = vmatprep.subr.bf16.mxu0 0
  %467 = vmatpush1.bf16.xpose.msra.mxu0 0
  %468 = vmatprep.subr.bf16.mxu0 0
  %469 = vmatpush1.bf16.xpose.msra.mxu0 0
  %470 = vmatprep.subr.bf16.mxu0 0
  %471 = vmatpush1.bf16.xpose.msra.mxu0 0
  %472 = vmatprep.subr.bf16.mxu0 0
  %473 = vmatpush1.bf16.xpose.msra.mxu0 0
  %474 = vmatprep.subr.bf16.mxu0 0
  %475 = vmatpush1.bf16.xpose.msra.mxu0 0
  %476 = vmatprep.subr.bf16.mxu0 0
  %477 = vmatpush1.bf16.xpose.msra.mxu0 0
  %478 = vmatprep.subr.bf16.mxu0 0
  %479 = vmatpush1.bf16.xpose.msra.mxu0 0
  %480 = vmatprep.mubr.bf16.mxu0 0
  %481 = vmatmul.mubr.bf16.gmra.mrb[0].mxu0 %v444
  %v482 = vpop.f32.mrb[0].mxu0
  %v483 = vadd.f32 %v230, %v482
  %v484 = vpop.f32.mrb[0].mxu0
  %v485 = vpop.f32.mrb[0].mxu0
  %v486 = vadd.f32 %v231, %v485
  %v487 = vpop.f32.mrb[0].mxu0
  %488 = vmatprep.mubr.bf16.mxu0 0
  %489 = vmatmul.mubr.bf16.gmra.mrb[0].mxu0 %v445
  %v490 = vpop.f32.mrb[0].mxu0
  %v491 = vadd.f32 %v232, %v490
  %v492 = vpop.f32.mrb[0].mxu0
  %v493 = vpop.f32.mrb[0].mxu0
  %v494 = vadd.f32 %v233, %v493
  %v495 = vpop.f32.mrb[0].mxu0
  %496 = vmatprep.mubr.bf16.mxu0 0
  %497 = vmatmul.mubr.bf16.gmra.mrb[0].mxu0 %v446
  %v498 = vpop.f32.mrb[0].mxu0
  %v499 = vadd.f32 %v234, %v498
  %v500 = vpop.f32.mrb[0].mxu0
  %v501 = vpop.f32.mrb[0].mxu0
  %v502 = vadd.f32 %v235, %v501
  %v503 = vpop.f32.mrb[0].mxu0
  %504 = vmatprep.mubr.bf16.mxu0 0
  %505 = vmatmul.mubr.bf16.gmra.mrb[0].mxu0 %v447
  %v506 = vpop.f32.mrb[0].mxu0
  %v507 = vadd.f32 %v236, %v506
  %v508 = vpop.f32.mrb[0].mxu0
  %v509 = vpop.f32.mrb[0].mxu0
  %v510 = vadd.f32 %v237, %v509
  %v511 = vpop.f32.mrb[0].mxu0
  %512 = vdwg.mxu0
  %v513 = vsel %vm353, %v483, -inf
  %514 = vmax.xlane.f32.xlu0 %v513
  %v515 = vpop.xlane.xlu0 %514
  %v516 = vsel %vm353, %v486, -inf
  %517 = vmax.xlane.f32.xlu0 %v516
  %v518 = vpop.xlane.xlu0 %517
  %v519 = vsel %vm353, %v491, -inf
  %520 = vmax.xlane.f32.xlu0 %v519
  %v521 = vpop.xlane.xlu0 %520
  %v522 = vsel %vm353, %v494, -inf
  %523 = vmax.xlane.f32.xlu0 %v522
  %v524 = vpop.xlane.xlu0 %523
  %v525 = vsel %vm353, %v499, -inf
  %526 = vmax.xlane.f32.xlu0 %v525
  %v527 = vpop.xlane.xlu0 %526
  %v528 = vsel %vm353, %v502, -inf
  %529 = vmax.xlane.f32.xlu0 %v528
  %v530 = vpop.xlane.xlu0 %529
  %v531 = vsel %vm353, %v507, -inf
  %532 = vmax.xlane.f32.xlu0 %v531
  %v533 = vpop.xlane.xlu0 %532
  %v534 = vsel %vm353, %v510, -inf
  %535 = vmax.xlane.f32.xlu0 %v534
  %v536 = vpop.xlane.xlu0 %535
  %v537 = vsub.f32 %v483, %v515
  %v538 = vsub.f32 %v486, %v518
  %v539 = vsub.f32 %v491, %v521
  %v540 = vsub.f32 %v494, %v524
  %v541 = vsub.f32 %v499, %v527
  %v542 = vsub.f32 %v502, %v530
  %v543 = vsub.f32 %v507, %v533
  %v544 = vsub.f32 %v510, %v536
  %v545 = vmul.f32 %v537, 1.442695
  %v546 = vpow.pop %v545
  %v547 = vmul.f32 %v538, 1.442695
  %v548 = vpow.pop %v547
  %v549 = vmul.f32 %v539, 1.442695
  %v550 = vpow.pop %v549
  %v551 = vmul.f32 %v540, 1.442695
  %v552 = vpow.pop %v551
  %v553 = vmul.f32 %v541, 1.442695
  %v554 = vpow.pop %v553
  %v555 = vmul.f32 %v542, 1.442695
  %v556 = vpow.pop %v555
  %v557 = vmul.f32 %v543, 1.442695
  %v558 = vpow.pop %v557
  %v559 = vmul.f32 %v544, 1.442695
  %v560 = vpow.pop %v559
  %v561 = vsel %vm353, %v546, 0.0
  %562 = vadd.xlane.f32.xlu0 %v561
  %v563 = vpop.xlane.xlu0 %562
  %v564 = vsel %vm353, %v548, 0.0
  %565 = vadd.xlane.f32.xlu0 %v564
  %v566 = vpop.xlane.xlu0 %565
  %v567 = vsel %vm353, %v550, 0.0
  %568 = vadd.xlane.f32.xlu0 %v567
  %v569 = vpop.xlane.xlu0 %568
  %v570 = vsel %vm353, %v552, 0.0
  %571 = vadd.xlane.f32.xlu0 %v570
  %v572 = vpop.xlane.xlu0 %571
  %v573 = vsel %vm353, %v554, 0.0
  %574 = vadd.xlane.f32.xlu0 %v573
  %v575 = vpop.xlane.xlu0 %574
  %v576 = vsel %vm353, %v556, 0.0
  %577 = vadd.xlane.f32.xlu0 %v576
  %v578 = vpop.xlane.xlu0 %577
  %v579 = vsel %vm353, %v558, 0.0
  %580 = vadd.xlane.f32.xlu0 %v579
  %v581 = vpop.xlane.xlu0 %580
  %v582 = vsel %vm353, %v560, 0.0
  %583 = vadd.xlane.f32.xlu0 %v582
  %v584 = vpop.xlane.xlu0 %583
  %v585 = vrcp.pop %v563
  %v586 = vrcp.pop %v566
  %v587 = vrcp.pop %v569
  %v588 = vrcp.pop %v572
  %v589 = vrcp.pop %v575
  %v590 = vrcp.pop %v578
  %v591 = vrcp.pop %v581
  %v592 = vrcp.pop %v584
  %v593 = vmul.f32 %v546, %v585
  %v594 = vmul.f32 %v548, %v586
  %v595 = vmul.f32 %v550, %v587
  %v596 = vmul.f32 %v552, %v588
  %v597 = vmul.f32 %v554, %v589
  %v598 = vmul.f32 %v556, %v590
  %v599 = vmul.f32 %v558, %v591
  %v600 = vmul.f32 %v560, %v592
  %v601 = vpack.c.bf16 %v594, %v593
  %v602 = vpack.c.bf16 %v596, %v595
  %v603 = vpack.c.bf16 %v598, %v597
  %v604 = vpack.c.bf16 %v600, %v599
  %v606 = vsel %vm353, %v601, 0
  %v609 = vsel %vm353, %v602, 0
  %v612 = vsel %vm353, %v603, 0
  %v615 = vsel %vm353, %v604, 0
  %617 = vmatprep.subr.bf16.mxu0 0
  %618 = vmatpush1.bf16.msra.mxu0 %v332
  %619 = vmatprep.subr.bf16.mxu0 0
  %620 = vmatpush1.bf16.msra.mxu0 0
  %621 = vmatprep.subr.bf16.mxu0 0
  %622 = vmatpush1.bf16.msra.mxu0 0
  %623 = vmatprep.subr.bf16.mxu0 0
  %624 = vmatpush1.bf16.msra.mxu0 0
  %625 = vmatprep.subr.bf16.mxu0 0
  %626 = vmatpush1.bf16.msra.mxu0 0
  %627 = vmatprep.subr.bf16.mxu0 0
  %628 = vmatpush1.bf16.msra.mxu0 0
  %629 = vmatprep.subr.bf16.mxu0 0
  %630 = vmatpush1.bf16.msra.mxu0 0
  %631 = vmatprep.subr.bf16.mxu0 0
  %632 = vmatpush1.bf16.msra.mxu0 0
  %633 = vmatprep.subr.bf16.mxu0 0
  %634 = vmatpush1.bf16.msra.mxu0 0
  %635 = vmatprep.subr.bf16.mxu0 0
  %636 = vmatpush1.bf16.msra.mxu0 0
  %637 = vmatprep.subr.bf16.mxu0 0
  %638 = vmatpush1.bf16.msra.mxu0 0
  %639 = vmatprep.subr.bf16.mxu0 0
  %640 = vmatpush1.bf16.msra.mxu0 0
  %641 = vmatprep.subr.bf16.mxu0 0
  %642 = vmatpush1.bf16.msra.mxu0 0
  %643 = vmatprep.subr.bf16.mxu0 0
  %644 = vmatpush1.bf16.msra.mxu0 0
  %645 = vmatprep.subr.bf16.mxu0 0
  %646 = vmatpush1.bf16.msra.mxu0 0
  %647 = vmatprep.subr.bf16.mxu0 0
  %648 = vmatpush1.bf16.msra.mxu0 0
  %649 = vmatprep.mubr.bf16.mxu0 0
  %650 = vmatmul.mubr.bf16.gmra.mrb[0].mxu0 %v606
  %v651 = vpop.f32.mrb[0].mxu0
  %v652 = vadd.f32 0.0, %v651
  %v653 = vpop.f32.mrb[0].mxu0
  %v654 = vpop.f32.mrb[0].mxu0
  %v655 = vadd.f32 0.0, %v654
  %v656 = vpop.f32.mrb[0].mxu0
  %657 = vmatprep.mubr.bf16.mxu0 0
  %658 = vmatmul.mubr.bf16.gmra.mrb[0].mxu0 %v609
  %v659 = vpop.f32.mrb[0].mxu0
  %v660 = vadd.f32 0.0, %v659
  %v661 = vpop.f32.mrb[0].mxu0
  %v662 = vpop.f32.mrb[0].mxu0
  %v663 = vadd.f32 0.0, %v662
  %v664 = vpop.f32.mrb[0].mxu0
  %665 = vmatprep.mubr.bf16.mxu0 0
  %666 = vmatmul.mubr.bf16.gmra.mrb[0].mxu0 %v612
  %v667 = vpop.f32.mrb[0].mxu0
  %v668 = vadd.f32 0.0, %v667
  %v669 = vpop.f32.mrb[0].mxu0
  %v670 = vpop.f32.mrb[0].mxu0
  %v671 = vadd.f32 0.0, %v670
  %v672 = vpop.f32.mrb[0].mxu0
  %673 = vmatprep.mubr.bf16.mxu0 0
  %674 = vmatmul.mubr.bf16.gmra.mrb[0].mxu0 %v615
  %v675 = vpop.f32.mrb[0].mxu0
  %v676 = vadd.f32 0.0, %v675
  %v677 = vpop.f32.mrb[0].mxu0
  %v678 = vpop.f32.mrb[0].mxu0
  %v679 = vadd.f32 0.0, %v678
  %v680 = vpop.f32.mrb[0].mxu0
  %681 = vdwg.mxu0
  %v682 = vmul.f32 %v652, %v246
  %v683 = vmul.f32 %v655, %v247
  %v684 = vmul.f32 %v660, %v248
  %v685 = vmul.f32 %v663, %v249
  %v686 = vmul.f32 %v668, %v250
  %v687 = vmul.f32 %v671, %v251
  %v688 = vmul.f32 %v676, %v252
  %v689 = vmul.f32 %v679, %v253
  %v690 = vpack.c.bf16 %v683, %v682
  %v691 = vpack.c.bf16 %v685, %v684
  %v692 = vpack.c.bf16 %v687, %v686
  %v693 = vpack.c.bf16 %v689, %v688
  %v696 = vunpack.c.l.b16 %v262
  %v697 = vunpack.c.l.b16 %v263
  %v698 = vpack.c.b16 %v697, %v696
  %vm699 = vcmask 523264
  %v701 = vsel %vm699, %v698, 0
  %703 = vmatprep.subr.bf16.mxu0 0
  %704 = vmatpush1.bf16.msra.mxu0 %v690
  %705 = vmatprep.subr.bf16.mxu0 0
  %706 = vmatpush1.bf16.msra.mxu0 %v691
  %707 = vmatprep.subr.bf16.mxu0 0
  %708 = vmatpush1.bf16.msra.mxu0 %v692
  %709 = vmatprep.subr.bf16.mxu0 0
  %710 = vmatpush1.bf16.msra.mxu0 %v693
  %711 = vmatprep.subr.bf16.mxu0 0
  %712 = vmatpush1.bf16.msra.mxu0 0
  %713 = vmatprep.subr.bf16.mxu0 0
  %714 = vmatpush1.bf16.msra.mxu0 0
  %715 = vmatprep.subr.bf16.mxu0 0
  %716 = vmatpush1.bf16.msra.mxu0 0
  %717 = vmatprep.subr.bf16.mxu0 0
  %718 = vmatpush1.bf16.msra.mxu0 0
  %719 = vmatprep.subr.bf16.mxu0 0
  %720 = vmatpush1.bf16.msra.mxu0 0
  %721 = vmatprep.subr.bf16.mxu0 0
  %722 = vmatpush1.bf16.msra.mxu0 0
  %723 = vmatprep.subr.bf16.mxu0 0
  %724 = vmatpush1.bf16.msra.mxu0 0
  %725 = vmatprep.subr.bf16.mxu0 0
  %726 = vmatpush1.bf16.msra.mxu0 0
  %727 = vmatprep.subr.bf16.mxu0 0
  %728 = vmatpush1.bf16.msra.mxu0 0
  %729 = vmatprep.subr.bf16.mxu0 0
  %730 = vmatpush1.bf16.msra.mxu0 0
  %731 = vmatprep.subr.bf16.mxu0 0
  %732 = vmatpush1.bf16.msra.mxu0 0
  %733 = vmatprep.subr.bf16.mxu0 0
  %734 = vmatpush1.bf16.msra.mxu0 0
  %735 = vmatprep.mubr.bf16.mxu0 0
  %736 = vmatmul.mubr.bf16.gmra.mrb[0].mxu0 %v701
  %v737 = vpop.f32.mrb[0].mxu0
  %v738 = vadd.f32 0.0, %v737
  %v739 = vpop.f32.mrb[0].mxu0
  %v740 = vpop.f32.mrb[0].mxu0
  %v741 = vadd.f32 0.0, %v740
  %v742 = vpop.f32.mrb[0].mxu0
  %743 = vdwg.mxu0
  %v744 = vld [vmem:[%s14] sm:$0xf]
  %v745 = vld [vmem:[%s14 + $0x4] sm:$0xf]
  %v746 = vld [vmem:[%s14 + $0x8] sm:$0xf]
  %v747 = vld [vmem:[%s14 + $0xc] sm:$0xf]
  %v748 = vld [vmem:[%s14 + $0x10] sm:$0xf]
  %v749 = vld [vmem:[%s14 + $0x14] sm:$0xf]
  %v750 = vld [vmem:[%s14 + $0x18] sm:$0xf]
  %v751 = vld [vmem:[%s14 + $0x1c] sm:$0xf]
  %v752 = vld [vmem:[%s14 + $0x20] sm:$0xf]
  %v753 = vld [vmem:[%s14 + $0x24] sm:$0xf]
  %v754 = vld [vmem:[%s14 + $0x28] sm:$0xf]
  %v755 = vld [vmem:[%s14 + $0x2c] sm:$0xf]
  %v756 = vld [vmem:[%s14 + $0x30] sm:$0xf]
  %v757 = vld [vmem:[%s14 + $0x34] sm:$0xf]
  %v758 = vld [vmem:[%s14 + $0x38] sm:$0xf]
  %v759 = vld [vmem:[%s14 + $0x3c] sm:$0xf]
  %v760 = vpack.c.bf16 %v741, %v738
  %v761 = vld [vmem:[%s15] sm:$0x1]
  %v763 = vlaneseq
  %v764 = vshrl.u32 %v763, 7
  %v765 = vsub.s32 0, %v764
  %v766 = vrot.slane %v761, %v765
  %v784 = vunpack.c.l.b16 %v744
  %v785 = vunpack.c.l.b16 %v745
  %v786 = vunpack.c.l.b16 %v746
  %v787 = vunpack.c.l.b16 %v747
  %v788 = vunpack.c.l.b16 %v748
  %v789 = vunpack.c.l.b16 %v749
  %v790 = vunpack.c.l.b16 %v750
  %v791 = vunpack.c.l.b16 %v751
  %v792 = vunpack.c.l.b16 %v752
  %v793 = vunpack.c.l.b16 %v753
  %v794 = vunpack.c.l.b16 %v754
  %v795 = vunpack.c.l.b16 %v755
  %v796 = vunpack.c.l.b16 %v756
  %v797 = vunpack.c.l.b16 %v757
  %v798 = vunpack.c.l.b16 %v758
  %v799 = vunpack.c.l.b16 %v759
  %v800 = vpack.c.b16 %v785, %v784
  %v801 = vpack.c.b16 %v787, %v786
  %v802 = vpack.c.b16 %v789, %v788
  %v803 = vpack.c.b16 %v791, %v790
  %v804 = vpack.c.b16 %v793, %v792
  %v805 = vpack.c.b16 %v795, %v794
  %v806 = vpack.c.b16 %v797, %v796
  %v807 = vpack.c.b16 %v799, %v798
  %816 = vmatprep.subr.bf16.mxu0 0
  %817 = vmatpush1.bf16.msra.mxu0 %v800
  %818 = vmatprep.subr.bf16.mxu0 0
  %819 = vmatpush1.bf16.msra.mxu0 %v801
  %820 = vmatprep.subr.bf16.mxu0 0
  %821 = vmatpush1.bf16.msra.mxu0 %v802
  %822 = vmatprep.subr.bf16.mxu0 0
  %823 = vmatpush1.bf16.msra.mxu0 %v803
  %824 = vmatprep.subr.bf16.mxu0 0
  %825 = vmatpush1.bf16.msra.mxu0 %v804
  %826 = vmatprep.subr.bf16.mxu0 0
  %827 = vmatpush1.bf16.msra.mxu0 %v805
  %828 = vmatprep.subr.bf16.mxu0 0
  %829 = vmatpush1.bf16.msra.mxu0 %v806
  %830 = vmatprep.subr.bf16.mxu0 0
  %831 = vmatpush1.bf16.msra.mxu0 %v807
  %832 = vmatprep.subr.bf16.mxu0 0
  %833 = vmatpush1.bf16.msra.mxu0 0
  %834 = vmatprep.subr.bf16.mxu0 0
  %835 = vmatpush1.bf16.msra.mxu0 0
  %836 = vmatprep.subr.bf16.mxu0 0
  %837 = vmatpush1.bf16.msra.mxu0 0
  %838 = vmatprep.subr.bf16.mxu0 0
  %839 = vmatpush1.bf16.msra.mxu0 0
  %840 = vmatprep.subr.bf16.mxu0 0
  %841 = vmatpush1.bf16.msra.mxu0 0
  %842 = vmatprep.subr.bf16.mxu0 0
  %843 = vmatpush1.bf16.msra.mxu0 0
  %844 = vmatprep.subr.bf16.mxu0 0
  %845 = vmatpush1.bf16.msra.mxu0 0
  %846 = vmatprep.subr.bf16.mxu0 0
  %847 = vmatpush1.bf16.msra.mxu0 0
  %848 = vmatprep.mubr.bf16.mxu0 0
  %849 = vmatmul.mubr.bf16.gmra.mrb[0].mxu0 %v760
  %v850 = vpop.f32.mrb[0].mxu0
  %v851 = vadd.f32 %v766, %v850
  %v852 = vpop.f32.mrb[0].mxu0
  %v853 = vpop.f32.mrb[0].mxu0
  %v854 = vadd.f32 %v766, %v853
  %v855 = vpop.f32.mrb[0].mxu0
  %856 = vdwg.mxu0
  %v857 = vadd.f32 %v228, %v851
  %v858 = vadd.f32 %v229, %v854
  %v859 = vld [vmem:[%s16] sm:$0x1]
  %v860 = vld [vmem:[%s17] sm:$0x1]
  %v861 = vsel %vm182, %v857, 0.0
  %862 = vadd.xlane.f32.xlu0 %v861
  %v863 = vpop.xlane.xlu0 %862
  %v864 = vsel %vm182, %v858, 0.0
  %865 = vadd.xlane.f32.xlu0 %v864
  %v866 = vpop.xlane.xlu0 %865
  %v867 = vmul.f32 %v863, %v189
  %v868 = vmul.f32 %v866, %v189
  %v869 = vmul.f32 %v857, %v857
  %v870 = vmul.f32 %v858, %v858
  %v871 = vsel %vm182, %v869, 0.0
  %872 = vadd.xlane.f32.xlu0 %v871
  %v873 = vpop.xlane.xlu0 %872
  %v874 = vsel %vm182, %v870, 0.0
  %875 = vadd.xlane.f32.xlu0 %v874
  %v876 = vpop.xlane.xlu0 %875
  %v877 = vmul.f32 %v873, %v189
  %v878 = vmul.f32 %v876, %v189
  %v879 = vmul.f32 %v867, %v867
  %v880 = vmul.f32 %v868, %v868
  %v881 = vsub.f32 %v877, %v879
  %v882 = vsub.f32 %v878, %v880
  %v883 = vsub.f32 %v857, %v867
  %v884 = vsub.f32 %v858, %v868
  %v885 = vadd.f32 %v881, 1e-12
  %v886 = vadd.f32 %v882, 1e-12
  %v887 = vrsqrt.pop %v885
  %v888 = vrsqrt.pop %v886
  %v889 = vmul.f32 %v883, %v887
  %v890 = vmul.f32 %v884, %v888
  %v892 = vlaneseq
  %v893 = vshrl.u32 %v892, 7
  %v894 = vsub.s32 0, %v893
  %v895 = vrot.slane %v859, %v894
  %v897 = vmul.f32 %v889, %v895
  %v898 = vmul.f32 %v890, %v895
  %v900 = vlaneseq
  %v901 = vshrl.u32 %v900, 7
  %v902 = vsub.s32 0, %v901
  %v903 = vrot.slane %v860, %v902
  %v905 = vadd.f32 %v897, %v903
  %v906 = vadd.f32 %v898, %v903
  %v907 = vld [vmem:[%s18] sm:$0xf]
  %v908 = vld [vmem:[%s18 + $0x4] sm:$0xf]
  %v909 = vld [vmem:[%s18 + $0x8] sm:$0xf]
  %v910 = vld [vmem:[%s18 + $0xc] sm:$0xf]
  %v911 = vpack.c.bf16 %v906, %v905
  %v912 = vld [vmem:[%s19] sm:$0x1]
  %v914 = vlaneseq
  %v915 = vshrl.u32 %v914, 7
  %v916 = vsub.s32 0, %v915
  %v917 = vrot.slane %v912, %v916
  %v923 = vunpack.c.l.b16 %v907
  %v924 = vunpack.c.l.b16 %v908
  %v925 = vunpack.c.l.b16 %v909
  %v926 = vunpack.c.l.b16 %v910
  %v927 = vpack.c.b16 %v924, %v923
  %v928 = vpack.c.b16 %v926, %v925
  %v932 = vsel %vm182, %v911, 0
  %934 = vmatprep.subr.bf16.mxu0 0
  %935 = vmatpush1.bf16.msra.mxu0 %v927
  %936 = vmatprep.subr.bf16.mxu0 0
  %937 = vmatpush1.bf16.msra.mxu0 %v928
  %938 = vmatprep.subr.bf16.mxu0 0
  %939 = vmatpush1.bf16.msra.mxu0 0
  %940 = vmatprep.subr.bf16.mxu0 0
  %941 = vmatpush1.bf16.msra.mxu0 0
  %942 = vmatprep.subr.bf16.mxu0 0
  %943 = vmatpush1.bf16.msra.mxu0 0
  %944 = vmatprep.subr.bf16.mxu0 0
  %945 = vmatpush1.bf16.msra.mxu0 0
  %946 = vmatprep.subr.bf16.mxu0 0
  %947 = vmatpush1.bf16.msra.mxu0 0
  %948 = vmatprep.subr.bf16.mxu0 0
  %949 = vmatpush1.bf16.msra.mxu0 0
  %950 = vmatprep.subr.bf16.mxu0 0
  %951 = vmatpush1.bf16.msra.mxu0 0
  %952 = vmatprep.subr.bf16.mxu0 0
  %953 = vmatpush1.bf16.msra.mxu0 0
  %954 = vmatprep.subr.bf16.mxu0 0
  %955 = vmatpush1.bf16.msra.mxu0 0
  %956 = vmatprep.subr.bf16.mxu0 0
  %957 = vmatpush1.bf16.msra.mxu0 0
  %958 = vmatprep.subr.bf16.mxu0 0
  %959 = vmatpush1.bf16.msra.mxu0 0
  %960 = vmatprep.subr.bf16.mxu0 0
  %961 = vmatpush1.bf16.msra.mxu0 0
  %962 = vmatprep.subr.bf16.mxu0 0
  %963 = vmatpush1.bf16.msra.mxu0 0
  %964 = vmatprep.subr.bf16.mxu0 0
  %965 = vmatpush1.bf16.msra.mxu0 0
  %966 = vmatprep.mubr.bf16.mxu0 0
  %967 = vmatmul.mubr.bf16.gmra.mrb[0].mxu0 %v932
  %v968 = vpop.f32.mrb[0].mxu0
  %v969 = vadd.f32 %v917, %v968
  %v970 = vpop.f32.mrb[0].mxu0
  %v971 = vpop.f32.mrb[0].mxu0
  %v972 = vadd.f32 %v917, %v971
  %v973 = vpop.f32.mrb[0].mxu0
  %974 = vdwg.mxu0
  %v975 = vmul.f32 %v969, 0.5
  %v976 = vmul.f32 %v972, 0.5
  %v977 = vmul.f32 %v969, 0.044715
  %v978 = vmul.f32 %v972, 0.044715
  %v979 = vmul.f32 %v977, %v969
  %v980 = vmul.f32 %v978, %v972
  %v981 = vmul.f32 %v979, %v969
  %v982 = vmul.f32 %v980, %v972
  %v983 = vadd.f32 %v969, %v981
  %v984 = vadd.f32 %v972, %v982
  %v985 = vmul.f32 %v983, 0.7978846
  %v986 = vmul.f32 %v984, 0.7978846
  %v987 = vtanh.pop %v985
  %v988 = vtanh.pop %v986
  %v989 = vadd.f32 %v987, 1.0
  %v990 = vadd.f32 %v988, 1.0
  %v991 = vmul.f32 %v975, %v989
  %v992 = vmul.f32 %v976, %v990
  %v993 = vld [vmem:[%s20] sm:$0xf]
  %v994 = vld [vmem:[%s20 + $0x4] sm:$0xf]
  %v995 = vld [vmem:[%s20 + $0x8] sm:$0xf]
  %v996 = vld [vmem:[%s20 + $0xc] sm:$0xf]
  %v997 = vld [vmem:[%s20 + $0x10] sm:$0xf]
  %v998 = vld [vmem:[%s20 + $0x14] sm:$0xf]
  %v999 = vld [vmem:[%s20 + $0x18] sm:$0xf]
  %v1000 = vld [vmem:[%s20 + $0x1c] sm:$0xf]
  %v1001 = vpack.c.bf16 %v992, %v991
  %v1002 = vld [vmem:[%s21] sm:$0x1]
  %v1004 = vlaneseq
  %v1005 = vshrl.u32 %v1004, 7
  %v1006 = vsub.s32 0, %v1005
  %v1007 = vrot.slane %v1002, %v1006
  %v1017 = vunpack.c.l.b16 %v993
  %v1018 = vunpack.c.l.b16 %v994
  %v1019 = vunpack.c.l.b16 %v995
  %v1020 = vunpack.c.l.b16 %v996
  %v1021 = vunpack.c.l.b16 %v997
  %v1022 = vunpack.c.l.b16 %v998
  %v1023 = vunpack.c.l.b16 %v999
  %v1024 = vunpack.c.l.b16 %v1000
  %v1025 = vpack.c.b16 %v1018, %v1017
  %v1026 = vpack.c.b16 %v1020, %v1019
  %v1027 = vpack.c.b16 %v1022, %v1021
  %v1028 = vpack.c.b16 %v1024, %v1023
  %v1034 = vsel %vm699, %v1001, 0
  %1036 = vmatprep.subr.bf16.mxu0 0
  %1037 = vmatpush1.bf16.msra.mxu0 %v1025
  %1038 = vmatprep.subr.bf16.mxu0 0
  %1039 = vmatpush1.bf16.msra.mxu0 %v1026
  %1040 = vmatprep.subr.bf16.mxu0 0
  %1041 = vmatpush1.bf16.msra.mxu0 %v1027
  %1042 = vmatprep.subr.bf16.mxu0 0
  %1043 = vmatpush1.bf16.msra.mxu0 %v1028
  %1044 = vmatprep.subr.bf16.mxu0 0
  %1045 = vmatpush1.bf16.msra.mxu0 0
  %1046 = vmatprep.subr.bf16.mxu0 0
  %1047 = vmatpush1.bf16.msra.mxu0 0
  %1048 = vmatprep.subr.bf16.mxu0 0
  %1049 = vmatpush1.bf16.msra.mxu0 0
  %1050 = vmatprep.subr.bf16.mxu0 0
  %1051 = vmatpush1.bf16.msra.mxu0 0
  %1052 = vmatprep.subr.bf16.mxu0 0
  %1053 = vmatpush1.bf16.msra.mxu0 0
  %1054 = vmatprep.subr.bf16.mxu0 0
  %1055 = vmatpush1.bf16.msra.mxu0 0
  %1056 = vmatprep.subr.bf16.mxu0 0
  %1057 = vmatpush1.bf16.msra.mxu0 0
  %1058 = vmatprep.subr.bf16.mxu0 0
  %1059 = vmatpush1.bf16.msra.mxu0 0
  %1060 = vmatprep.subr.bf16.mxu0 0
  %1061 = vmatpush1.bf16.msra.mxu0 0
  %1062 = vmatprep.subr.bf16.mxu0 0
  %1063 = vmatpush1.bf16.msra.mxu0 0
  %1064 = vmatprep.subr.bf16.mxu0 0
  %1065 = vmatpush1.bf16.msra.mxu0 0
  %1066 = vmatprep.subr.bf16.mxu0 0
  %1067 = vmatpush1.bf16.msra.mxu0 0
  %1068 = vmatprep.mubr.bf16.mxu0 0
  %1069 = vmatmul.mubr.bf16.gmra.mrb[0].mxu0 %v1034
  %v1070 = vpop.f32.mrb[0].mxu0
  %v1071 = vadd.f32 %v1007, %v1070
  %v1072 = vpop.f32.mrb[0].mxu0
  %v1073 = vpop.f32.mrb[0].mxu0
  %v1074 = vadd.f32 %v1007, %v1073
  %v1075 = vpop.f32.mrb[0].mxu0
  %1076 = vdwg.mxu0
  %v1077 = vadd.f32 %v905, %v1071
  %v1078 = vadd.f32 %v906, %v1074
  %v1079 = vld [vmem:[%s22] sm:$0x1]
  %v1080 = vld [vmem:[%s23] sm:$0x1]
  %v1081 = vsel %vm182, %v1077, 0.0
  %1082 = vadd.xlane.f32.xlu0 %v1081
  %v1083 = vpop.xlane.xlu0 %1082
  %v1084 = vsel %vm182, %v1078, 0.0
  %1085 = vadd.xlane.f32.xlu0 %v1084
  %v1086 = vpop.xlane.xlu0 %1085
  %v1087 = vmul.f32 %v1083, %v189
  %v1088 = vmul.f32 %v1086, %v189
  %v1089 = vmul.f32 %v1077, %v1077
  %v1090 = vmul.f32 %v1078, %v1078
  %v1091 = vsel %vm182, %v1089, 0.0
  %1092 = vadd.xlane.f32.xlu0 %v1091
  %v1093 = vpop.xlane.xlu0 %1092
  %v1094 = vsel %vm182, %v1090, 0.0
  %1095 = vadd.xlane.f32.xlu0 %v1094
  %v1096 = vpop.xlane.xlu0 %1095
  %v1097 = vmul.f32 %v1093, %v189
  %v1098 = vmul.f32 %v1096, %v189
  %v1099 = vmul.f32 %v1087, %v1087
  %v1100 = vmul.f32 %v1088, %v1088
  %v1101 = vsub.f32 %v1097, %v1099
  %v1102 = vsub.f32 %v1098, %v1100
  %v1103 = vsub.f32 %v1077, %v1087
  %v1104 = vsub.f32 %v1078, %v1088
  %v1105 = vadd.f32 %v1101, 1e-12
  %v1106 = vadd.f32 %v1102, 1e-12
  %v1107 = vrsqrt.pop %v1105
  %v1108 = vrsqrt.pop %v1106
  %v1109 = vmul.f32 %v1103, %v1107
  %v1110 = vmul.f32 %v1104, %v1108
  %v1112 = vlaneseq
  %v1113 = vshrl.u32 %v1112, 7
  %v1114 = vsub.s32 0, %v1113
  %v1115 = vrot.slane %v1079, %v1114
  %v1117 = vmul.f32 %v1109, %v1115
  %v1118 = vmul.f32 %v1110, %v1115
  %v1120 = vlaneseq
  %v1121 = vshrl.u32 %v1120, 7
  %v1122 = vsub.s32 0, %v1121
  %v1123 = vrot.slane %v1080, %v1122
  %v1125 = vadd.f32 %v1117, %v1123
  %v1126 = vadd.f32 %v1118, %v1123
  %s1127 = scalar_lea.vmem %s12, 16
  %v1128 = vld [vmem:[%s1127] sm:$0xf]
  %v1129 = vld [vmem:[%s1127 + $0x4] sm:$0xf]
  %v1130 = vld [vmem:[%s1127 + $0x8] sm:$0xf]
  %v1131 = vld [vmem:[%s1127 + $0xc] sm:$0xf]
  %v1132 = vpack.c.bf16 %v1126, %v1125
  %s1133 = scalar_lea.vmem %s13, 1
  %v1134 = vld [vmem:[%s1133] sm:$0x1]
  %v1136 = vlaneseq
  %v1137 = vshrl.u32 %v1136, 7
  %v1138 = vsub.s32 0, %v1137
  %v1139 = vrot.slane %v1134, %v1138
  %v1145 = vunpack.c.l.b16 %v1128
  %v1146 = vunpack.c.l.b16 %v1129
  %v1147 = vunpack.c.l.b16 %v1130
  %v1148 = vunpack.c.l.b16 %v1131
  %v1149 = vpack.c.b16 %v1146, %v1145
  %v1150 = vpack.c.b16 %v1148, %v1147
  %v1154 = vsel %vm182, %v1132, 0
  %1156 = vmatprep.subr.bf16.mxu0 0
  %1157 = vmatpush1.bf16.msra.mxu0 %v1149
  %1158 = vmatprep.subr.bf16.mxu0 0
  %1159 = vmatpush1.bf16.msra.mxu0 %v1150
  %1160 = vmatprep.subr.bf16.mxu0 0
  %1161 = vmatpush1.bf16.msra.mxu0 0
  %1162 = vmatprep.subr.bf16.mxu0 0
  %1163 = vmatpush1.bf16.msra.mxu0 0
  %1164 = vmatprep.subr.bf16.mxu0 0
  %1165 = vmatpush1.bf16.msra.mxu0 0
  %1166 = vmatprep.subr.bf16.mxu0 0
  %1167 = vmatpush1.bf16.msra.mxu0 0
  %1168 = vmatprep.subr.bf16.mxu0 0
  %1169 = vmatpush1.bf16.msra.mxu0 0
  %1170 = vmatprep.subr.bf16.mxu0 0
  %1171 = vmatpush1.bf16.msra.mxu0 0
  %1172 = vmatprep.subr.bf16.mxu0 0
  %1173 = vmatpush1.bf16.msra.mxu0 0
  %1174 = vmatprep.subr.bf16.mxu0 0
  %1175 = vmatpush1.bf16.msra.mxu0 0
  %1176 = vmatprep.subr.bf16.mxu0 0
  %1177 = vmatpush1.bf16.msra.mxu0 0
  %1178 = vmatprep.subr.bf16.mxu0 0
  %1179 = vmatpush1.bf16.msra.mxu0 0
  %1180 = vmatprep.subr.bf16.mxu0 0
  %1181 = vmatpush1.bf16.msra.mxu0 0
  %1182 = vmatprep.subr.bf16.mxu0 0
  %1183 = vmatpush1.bf16.msra.mxu0 0
  %1184 = vmatprep.subr.bf16.mxu0 0
  %1185 = vmatpush1.bf16.msra.mxu0 0
  %1186 = vmatprep.subr.bf16.mxu0 0
  %1187 = vmatpush1.bf16.msra.mxu0 0
  %1188 = vmatprep.mubr.bf16.mxu0 0
  %1189 = vmatmul.mubr.bf16.gmra.mrb[0].mxu0 %v1154
  %v1190 = vpop.f32.mrb[0].mxu0
  %v1191 = vadd.f32 %v1139, %v1190
  %v1192 = vpop.f32.mrb[0].mxu0
  %v1193 = vpop.f32.mrb[0].mxu0
  %v1194 = vadd.f32 %v1139, %v1193
  %v1195 = vpop.f32.mrb[0].mxu0
  %1196 = vdwg.mxu0
  %v1197 = vpack.c.bf16 %v1194, %v1191
  %1198 = vmatprep.subr.bf16.mxu0 0
  %1199 = vmatpush1.bf16.msra.mxu0 %v1197
  %1200 = vmatprep.subr.bf16.mxu0 0
  %1201 = vmatpush1.bf16.msra.mxu0 0
  %1202 = vmatprep.subr.bf16.mxu0 0
  %1203 = vmatpush1.bf16.msra.mxu0 0
  %1204 = vmatprep.subr.bf16.mxu0 0
  %1205 = vmatpush1.bf16.msra.mxu0 0
  %1206 = vmatprep.subr.bf16.mxu0 0
  %1207 = vmatpush1.bf16.msra.mxu0 0
  %1208 = vmatprep.subr.bf16.mxu0 0
  %1209 = vmatpush1.bf16.msra.mxu0 0
  %1210 = vmatprep.subr.bf16.mxu0 0
  %1211 = vmatpush1.bf16.msra.mxu0 0
  %1212 = vmatprep.subr.bf16.mxu0 0
  %1213 = vmatpush1.bf16.msra.mxu0 0
  %1214 = vmatprep.subr.bf16.mxu0 0
  %1215 = vmatpush1.bf16.msra.mxu0 0
  %1216 = vmatprep.subr.bf16.mxu0 0
  %1217 = vmatpush1.bf16.msra.mxu0 0
  %1218 = vmatprep.subr.bf16.mxu0 0
  %1219 = vmatpush1.bf16.msra.mxu0 0
  %1220 = vmatprep.subr.bf16.mxu0 0
  %1221 = vmatpush1.bf16.msra.mxu0 0
  %1222 = vmatprep.subr.bf16.mxu0 0
  %1223 = vmatpush1.bf16.msra.mxu0 0
  %1224 = vmatprep.subr.bf16.mxu0 0
  %1225 = vmatpush1.bf16.msra.mxu0 0
  %1226 = vmatprep.subr.bf16.mxu0 0
  %1227 = vmatpush1.bf16.msra.mxu0 0
  %1228 = vmatprep.subr.bf16.mxu0 0
  %1229 = vmatpush1.bf16.msra.mxu0 0
  %1230 = vmatprep.mubr.bf16.mxu0 0
  %1231 = vmatmul.mubr.bf16.gmra.mrb[0].mxu0 %v355
  %v1232 = vpop.f32.mrb[0].mxu0
  %v1233 = vadd.f32 0.0, %v1232
  %v1234 = vpop.f32.mrb[0].mxu0
  %v1235 = vpop.f32.mrb[0].mxu0
  %v1236 = vadd.f32 0.0, %v1235
  %v1237 = vpop.f32.mrb[0].mxu0
  %1238 = vmatprep.mubr.bf16.mxu0 0
  %1239 = vmatmul.mubr.bf16.gmra.mrb[0].mxu0 %v358
  %v1240 = vpop.f32.mrb[0].mxu0
  %v1241 = vadd.f32 0.0, %v1240
  %v1242 = vpop.f32.mrb[0].mxu0
  %v1243 = vpop.f32.mrb[0].mxu0
  %v1244 = vadd.f32 0.0, %v1243
  %v1245 = vpop.f32.mrb[0].mxu0
  %1246 = vmatprep.mubr.bf16.mxu0 0
  %1247 = vmatmul.mubr.bf16.gmra.mrb[0].mxu0 %v361
  %v1248 = vpop.f32.mrb[0].mxu0
  %v1249 = vadd.f32 0.0, %v1248
  %v1250 = vpop.f32.mrb[0].mxu0
  %v1251 = vpop.f32.mrb[0].mxu0
  %v1252 = vadd.f32 0.0, %v1251
  %v1253 = vpop.f32.mrb[0].mxu0
  %1254 = vmatprep.mubr.bf16.mxu0 0
  %1255 = vmatmul.mubr.bf16.gmra.mrb[0].mxu0 %v364
  %v1256 = vpop.f32.mrb[0].mxu0
  %v1257 = vadd.f32 0.0, %v1256
  %v1258 = vpop.f32.mrb[0].mxu0
  %v1259 = vpop.f32.mrb[0].mxu0
  %v1260 = vadd.f32 0.0, %v1259
  %v1261 = vpop.f32.mrb[0].mxu0
  %1262 = vdwg.mxu0
  %v1263 = vmul.f32 %v1233, %v238
  %v1264 = vmul.f32 %v1236, %v239
  %v1265 = vmul.f32 %v1241, %v240
  %v1266 = vmul.f32 %v1244, %v241
  %v1267 = vmul.f32 %v1249, %v242
  %v1268 = vmul.f32 %v1252, %v243
  %v1269 = vmul.f32 %v1257, %v244
  %v1270 = vmul.f32 %v1260, %v245
  %1271 = vrot.lane.b32.xlu0 %v1191, 64
  %v1272 = vpop.permute.xlu0 %1271
  %1273 = vrot.lane.b32.xlu0 %v1194, 64
  %v1274 = vpop.permute.xlu0 %1273
  %v1275 = vpack.c.bf16 %v1274, %v1272
  %v1276 = vpack.c.bf16 %v1264, %v1263
  %v1277 = vpack.c.bf16 %v1266, %v1265
  %v1278 = vpack.c.bf16 %v1268, %v1267
  %v1279 = vpack.c.bf16 %v1270, %v1269
  %1280 = vmatprep.subr.bf16.mxu0 0
  %1281 = vmatpush1.bf16.xpose.msra.mxu0 %v1275
  %1282 = vmatprep.subr.bf16.mxu0 0
  %1283 = vmatpush1.bf16.xpose.msra.mxu0 0
  %1284 = vmatprep.subr.bf16.mxu0 0
  %1285 = vmatpush1.bf16.xpose.msra.mxu0 0
  %1286 = vmatprep.subr.bf16.mxu0 0
  %1287 = vmatpush1.bf16.xpose.msra.mxu0 0
  %1288 = vmatprep.subr.bf16.mxu0 0
  %1289 = vmatpush1.bf16.xpose.msra.mxu0 0
  %1290 = vmatprep.subr.bf16.mxu0 0
  %1291 = vmatpush1.bf16.xpose.msra.mxu0 0
  %1292 = vmatprep.subr.bf16.mxu0 0
  %1293 = vmatpush1.bf16.xpose.msra.mxu0 0
  %1294 = vmatprep.subr.bf16.mxu0 0
  %1295 = vmatpush1.bf16.xpose.msra.mxu0 0
  %1296 = vmatprep.subr.bf16.mxu0 0
  %1297 = vmatpush1.bf16.xpose.msra.mxu0 0
  %1298 = vmatprep.subr.bf16.mxu0 0
  %1299 = vmatpush1.bf16.xpose.msra.mxu0 0
  %1300 = vmatprep.subr.bf16.mxu0 0
  %1301 = vmatpush1.bf16.xpose.msra.mxu0 0
  %1302 = vmatprep.subr.bf16.mxu0 0
  %1303 = vmatpush1.bf16.xpose.msra.mxu0 0
  %1304 = vmatprep.subr.bf16.mxu0 0
  %1305 = vmatpush1.bf16.xpose.msra.mxu0 0
  %1306 = vmatprep.subr.bf16.mxu0 0
  %1307 = vmatpush1.bf16.xpose.msra.mxu0 0
  %1308 = vmatprep.subr.bf16.mxu0 0
  %1309 = vmatpush1.bf16.xpose.msra.mxu0 0
  %1310 = vmatprep.subr.bf16.mxu0 0
  %1311 = vmatpush1.bf16.xpose.msra.mxu0 0
  %1312 = vmatprep.mubr.bf16.mxu0 0
  %1313 = vmatmul.mubr.bf16.gmra.mrb[0].mxu0 %v1276
  %v1314 = vpop.f32.mrb[0].mxu0
  %v1315 = vadd.f32 %v230, %v1314
  %v1316 = vpop.f32.mrb[0].mxu0
  %v1317 = vpop.f32.mrb[0].mxu0
  %v1318 = vadd.f32 %v231, %v1317
  %v1319 = vpop.f32.mrb[0].mxu0
  %1320 = vmatprep.mubr.bf16.mxu0 0
  %1321 = vmatmul.mubr.bf16.gmra.mrb[0].mxu0 %v1277
  %v1322 = vpop.f32.mrb[0].mxu0
  %v1323 = vadd.f32 %v232, %v1322
  %v1324 = vpop.f32.mrb[0].mxu0
  %v1325 = vpop.f32.mrb[0].mxu0
  %v1326 = vadd.f32 %v233, %v1325
  %v1327 = vpop.f32.mrb[0].mxu0
  %1328 = vmatprep.mubr.bf16.mxu0 0
  %1329 = vmatmul.mubr.bf16.gmra.mrb[0].mxu0 %v1278
  %v1330 = vpop.f32.mrb[0].mxu0
  %v1331 = vadd.f32 %v234, %v1330
  %v1332 = vpop.f32.mrb[0].mxu0
  %v1333 = vpop.f32.mrb[0].mxu0
  %v1334 = vadd.f32 %v235, %v1333
  %v1335 = vpop.f32.mrb[0].mxu0
  %1336 = vmatprep.mubr.bf16.mxu0 0
  %1337 = vmatmul.mubr.bf16.gmra.mrb[0].mxu0 %v1279
  %v1338 = vpop.f32.mrb[0].mxu0
  %v1339 = vadd.f32 %v236, %v1338
  %v1340 = vpop.f32.mrb[0].mxu0
  %v1341 = vpop.f32.mrb[0].mxu0
  %v1342 = vadd.f32 %v237, %v1341
  %v1343 = vpop.f32.mrb[0].mxu0
  %1344 = vdwg.mxu0
  %v1345 = vsel %vm353, %v1315, -inf
  %1346 = vmax.xlane.f32.xlu0 %v1345
  %v1347 = vpop.xlane.xlu0 %1346
  %v1348 = vsel %vm353, %v1318, -inf
  %1349 = vmax.xlane.f32.xlu0 %v1348
  %v1350 = vpop.xlane.xlu0 %1349
  %v1351 = vsel %vm353, %v1323, -inf
  %1352 = vmax.xlane.f32.xlu0 %v1351
  %v1353 = vpop.xlane.xlu0 %1352
  %v1354 = vsel %vm353, %v1326, -inf
  %1355 = vmax.xlane.f32.xlu0 %v1354
  %v1356 = vpop.xlane.xlu0 %1355
  %v1357 = vsel %vm353, %v1331, -inf
  %1358 = vmax.xlane.f32.xlu0 %v1357
  %v1359 = vpop.xlane.xlu0 %1358
  %v1360 = vsel %vm353, %v1334, -inf
  %1361 = vmax.xlane.f32.xlu0 %v1360
  %v1362 = vpop.xlane.xlu0 %1361
  %v1363 = vsel %vm353, %v1339, -inf
  %1364 = vmax.xlane.f32.xlu0 %v1363
  %v1365 = vpop.xlane.xlu0 %1364
  %v1366 = vsel %vm353, %v1342, -inf
  %1367 = vmax.xlane.f32.xlu0 %v1366
  %v1368 = vpop.xlane.xlu0 %1367
  %v1369 = vsub.f32 %v1315, %v1347
  %v1370 = vsub.f32 %v1318, %v1350
  %v1371 = vsub.f32 %v1323, %v1353
  %v1372 = vsub.f32 %v1326, %v1356
  %v1373 = vsub.f32 %v1331, %v1359
  %v1374 = vsub.f32 %v1334, %v1362
  %v1375 = vsub.f32 %v1339, %v1365
  %v1376 = vsub.f32 %v1342, %v1368
  %v1377 = vmul.f32 %v1369, 1.442695
  %v1378 = vpow.pop %v1377
  %v1379 = vmul.f32 %v1370, 1.442695
  %v1380 = vpow.pop %v1379
  %v1381 = vmul.f32 %v1371, 1.442695
  %v1382 = vpow.pop %v1381
  %v1383 = vmul.f32 %v1372, 1.442695
  %v1384 = vpow.pop %v1383
  %v1385 = vmul.f32 %v1373, 1.442695
  %v1386 = vpow.pop %v1385
  %v1387 = vmul.f32 %v1374, 1.442695
  %v1388 = vpow.pop %v1387
  %v1389 = vmul.f32 %v1375, 1.442695
  %v1390 = vpow.pop %v1389
  %v1391 = vmul.f32 %v1376, 1.442695
  %v1392 = vpow.pop %v1391
  %v1393 = vsel %vm353, %v1378, 0.0
  %1394 = vadd.xlane.f32.xlu0 %v1393
  %v1395 = vpop.xlane.xlu0 %1394
  %v1396 = vsel %vm353, %v1380, 0.0
  %1397 = vadd.xlane.f32.xlu0 %v1396
  %v1398 = vpop.xlane.xlu0 %1397
  %v1399 = vsel %vm353, %v1382, 0.0
  %1400 = vadd.xlane.f32.xlu0 %v1399
  %v1401 = vpop.xlane.xlu0 %1400
  %v1402 = vsel %vm353, %v1384, 0.0
  %1403 = vadd.xlane.f32.xlu0 %v1402
  %v1404 = vpop.xlane.xlu0 %1403
  %v1405 = vsel %vm353, %v1386, 0.0
  %1406 = vadd.xlane.f32.xlu0 %v1405
  %v1407 = vpop.xlane.xlu0 %1406
  %v1408 = vsel %vm353, %v1388, 0.0
  %1409 = vadd.xlane.f32.xlu0 %v1408
  %v1410 = vpop.xlane.xlu0 %1409
  %v1411 = vsel %vm353, %v1390, 0.0
  %1412 = vadd.xlane.f32.xlu0 %v1411
  %v1413 = vpop.xlane.xlu0 %1412
  %v1414 = vsel %vm353, %v1392, 0.0
  %1415 = vadd.xlane.f32.xlu0 %v1414
  %v1416 = vpop.xlane.xlu0 %1415
  %v1417 = vrcp.pop %v1395
  %v1418 = vrcp.pop %v1398
  %v1419 = vrcp.pop %v1401
  %v1420 = vrcp.pop %v1404
  %v1421 = vrcp.pop %v1407
  %v1422 = vrcp.pop %v1410
  %v1423 = vrcp.pop %v1413
  %v1424 = vrcp.pop %v1416
  %v1425 = vmul.f32 %v1378, %v1417
  %v1426 = vmul.f32 %v1380, %v1418
  %v1427 = vmul.f32 %v1382, %v1419
  %v1428 = vmul.f32 %v1384, %v1420
  %v1429 = vmul.f32 %v1386, %v1421
  %v1430 = vmul.f32 %v1388, %v1422
  %v1431 = vmul.f32 %v1390, %v1423
  %v1432 = vmul.f32 %v1392, %v1424
  %v1433 = vpack.c.bf16 %v1426, %v1425
  %v1434 = vpack.c.bf16 %v1428, %v1427
  %v1435 = vpack.c.bf16 %v1430, %v1429
  %v1436 = vpack.c.bf16 %v1432, %v1431
  %v1438 = vsel %vm353, %v1433, 0
  %v1441 = vsel %vm353, %v1434, 0
  %v1444 = vsel %vm353, %v1435, 0
  %v1447 = vsel %vm353, %v1436, 0
  %1449 = vmatprep.subr.bf16.mxu0 0
  %1450 = vmatpush1.bf16.msra.mxu0 %v1197
  %1451 = vmatprep.subr.bf16.mxu0 0
  %1452 = vmatpush1.bf16.msra.mxu0 0
  %1453 = vmatprep.subr.bf16.mxu0 0
  %1454 = vmatpush1.bf16.msra.mxu0 0
  %1455 = vmatprep.subr.bf16.mxu0 0
  %1456 = vmatpush1.bf16.msra.mxu0 0
  %1457 = vmatprep.subr.bf16.mxu0 0
  %1458 = vmatpush1.bf16.msra.mxu0 0
  %1459 = vmatprep.subr.bf16.mxu0 0
  %1460 = vmatpush1.bf16.msra.mxu0 0
  %1461 = vmatprep.subr.bf16.mxu0 0
  %1462 = vmatpush1.bf16.msra.mxu0 0
  %1463 = vmatprep.subr.bf16.mxu0 0
  %1464 = vmatpush1.bf16.msra.mxu0 0
  %1465 = vmatprep.subr.bf16.mxu0 0
  %1466 = vmatpush1.bf16.msra.mxu0 0
  %1467 = vmatprep.subr.bf16.mxu0 0
  %1468 = vmatpush1.bf16.msra.mxu0 0
  %1469 = vmatprep.subr.bf16.mxu0 0
  %1470 = vmatpush1.bf16.msra.mxu0 0
  %1471 = vmatprep.subr.bf16.mxu0 0
  %1472 = vmatpush1.bf16.msra.mxu0 0
  %1473 = vmatprep.subr.bf16.mxu0 0
  %1474 = vmatpush1.bf16.msra.mxu0 0
  %1475 = vmatprep.subr.bf16.mxu0 0
  %1476 = vmatpush1.bf16.msra.mxu0 0
  %1477 = vmatprep.subr.bf16.mxu0 0
  %1478 = vmatpush1.bf16.msra.mxu0 0
  %1479 = vmatprep.subr.bf16.mxu0 0
  %1480 = vmatpush1.bf16.msra.mxu0 0
  %1481 = vmatprep.mubr.bf16.mxu0 0
  %1482 = vmatmul.mubr.bf16.gmra.mrb[0].mxu0 %v1438
  %v1483 = vpop.f32.mrb[0].mxu0
  %v1484 = vadd.f32 0.0, %v1483
  %v1485 = vpop.f32.mrb[0].mxu0
  %v1486 = vpop.f32.mrb[0].mxu0
  %v1487 = vadd.f32 0.0, %v1486
  %v1488 = vpop.f32.mrb[0].mxu0
  %1489 = vmatprep.mubr.bf16.mxu0 0
  %1490 = vmatmul.mubr.bf16.gmra.mrb[0].mxu0 %v1441
  %v1491 = vpop.f32.mrb[0].mxu0
  %v1492 = vadd.f32 0.0, %v1491
  %v1493 = vpop.f32.mrb[0].mxu0
  %v1494 = vpop.f32.mrb[0].mxu0
  %v1495 = vadd.f32 0.0, %v1494
  %v1496 = vpop.f32.mrb[0].mxu0
  %1497 = vmatprep.mubr.bf16.mxu0 0
  %1498 = vmatmul.mubr.bf16.gmra.mrb[0].mxu0 %v1444
  %v1499 = vpop.f32.mrb[0].mxu0
  %v1500 = vadd.f32 0.0, %v1499
  %v1501 = vpop.f32.mrb[0].mxu0
  %v1502 = vpop.f32.mrb[0].mxu0
  %v1503 = vadd.f32 0.0, %v1502
  %v1504 = vpop.f32.mrb[0].mxu0
  %1505 = vmatprep.mubr.bf16.mxu0 0
  %1506 = vmatmul.mubr.bf16.gmra.mrb[0].mxu0 %v1447
  %v1507 = vpop.f32.mrb[0].mxu0
  %v1508 = vadd.f32 0.0, %v1507
  %v1509 = vpop.f32.mrb[0].mxu0
  %v1510 = vpop.f32.mrb[0].mxu0
  %v1511 = vadd.f32 0.0, %v1510
  %v1512 = vpop.f32.mrb[0].mxu0
  %1513 = vdwg.mxu0
  %v1514 = vmul.f32 %v1484, %v246
  %v1515 = vmul.f32 %v1487, %v247
  %v1516 = vmul.f32 %v1492, %v248
  %v1517 = vmul.f32 %v1495, %v249
  %v1518 = vmul.f32 %v1500, %v250
  %v1519 = vmul.f32 %v1503, %v251
  %v1520 = vmul.f32 %v1508, %v252
  %v1521 = vmul.f32 %v1511, %v253
  %v1522 = vpack.c.bf16 %v1515, %v1514
  %v1523 = vpack.c.bf16 %v1517, %v1516
  %v1524 = vpack.c.bf16 %v1519, %v1518
  %v1525 = vpack.c.bf16 %v1521, %v1520
  %1526 = vmatprep.subr.bf16.mxu0 0
  %1527 = vmatpush1.bf16.msra.mxu0 %v1522
  %1528 = vmatprep.subr.bf16.mxu0 0
  %1529 = vmatpush1.bf16.msra.mxu0 %v1523
  %1530 = vmatprep.subr.bf16.mxu0 0
  %1531 = vmatpush1.bf16.msra.mxu0 %v1524
  %1532 = vmatprep.subr.bf16.mxu0 0
  %1533 = vmatpush1.bf16.msra.mxu0 %v1525
  %1534 = vmatprep.subr.bf16.mxu0 0
  %1535 = vmatpush1.bf16.msra.mxu0 0
  %1536 = vmatprep.subr.bf16.mxu0 0
  %1537 = vmatpush1.bf16.msra.mxu0 0
  %1538 = vmatprep.subr.bf16.mxu0 0
  %1539 = vmatpush1.bf16.msra.mxu0 0
  %1540 = vmatprep.subr.bf16.mxu0 0
  %1541 = vmatpush1.bf16.msra.mxu0 0
  %1542 = vmatprep.subr.bf16.mxu0 0
  %1543 = vmatpush1.bf16.msra.mxu0 0
  %1544 = vmatprep.subr.bf16.mxu0 0
  %1545 = vmatpush1.bf16.msra.mxu0 0
  %1546 = vmatprep.subr.bf16.mxu0 0
  %1547 = vmatpush1.bf16.msra.mxu0 0
  %1548 = vmatprep.subr.bf16.mxu0 0
  %1549 = vmatpush1.bf16.msra.mxu0 0
  %1550 = vmatprep.subr.bf16.mxu0 0
  %1551 = vmatpush1.bf16.msra.mxu0 0
  %1552 = vmatprep.subr.bf16.mxu0 0
  %1553 = vmatpush1.bf16.msra.mxu0 0
  %1554 = vmatprep.subr.bf16.mxu0 0
  %1555 = vmatpush1.bf16.msra.mxu0 0
  %1556 = vmatprep.subr.bf16.mxu0 0
  %1557 = vmatpush1.bf16.msra.mxu0 0
  %1558 = vmatprep.mubr.bf16.mxu0 0
  %1559 = vmatmul.mubr.bf16.gmra.mrb[0].mxu0 %v701
  %v1560 = vpop.f32.mrb[0].mxu0
  %v1561 = vadd.f32 0.0, %v1560
  %v1562 = vpop.f32.mrb[0].mxu0
  %v1563 = vpop.f32.mrb[0].mxu0
  %v1564 = vadd.f32 0.0, %v1563
  %v1565 = vpop.f32.mrb[0].mxu0
  %1566 = vdwg.mxu0
  %s1567 = scalar_lea.vmem %s14, 64
  %v1568 = vld [vmem:[%s1567] sm:$0xf]
  %v1569 = vld [vmem:[%s1567 + $0x4] sm:$0xf]
  %v1570 = vld [vmem:[%s1567 + $0x8] sm:$0xf]
  %v1571 = vld [vmem:[%s1567 + $0xc] sm:$0xf]
  %v1572 = vld [vmem:[%s1567 + $0x10] sm:$0xf]
  %v1573 = vld [vmem:[%s1567 + $0x14] sm:$0xf]
  %v1574 = vld [vmem:[%s1567 + $0x18] sm:$0xf]
  %v1575 = vld [vmem:[%s1567 + $0x1c] sm:$0xf]
  %v1576 = vld [vmem:[%s1567 + $0x20] sm:$0xf]
  %v1577 = vld [vmem:[%s1567 + $0x24] sm:$0xf]
  %v1578 = vld [vmem:[%s1567 + $0x28] sm:$0xf]
  %v1579 = vld [vmem:[%s1567 + $0x2c] sm:$0xf]
  %v1580 = vld [vmem:[%s1567 + $0x30] sm:$0xf]
  %v1581 = vld [vmem:[%s1567 + $0x34] sm:$0xf]
  %v1582 = vld [vmem:[%s1567 + $0x38] sm:$0xf]
  %v1583 = vld [vmem:[%s1567 + $0x3c] sm:$0xf]
  %v1584 = vpack.c.bf16 %v1564, %v1561
  %s1585 = scalar_lea.vmem %s15, 1
  %v1586 = vld [vmem:[%s1585] sm:$0x1]
  %v1588 = vlaneseq
  %v1589 = vshrl.u32 %v1588, 7
  %v1590 = vsub.s32 0, %v1589
  %v1591 = vrot.slane %v1586, %v1590
  %v1609 = vunpack.c.l.b16 %v1568
  %v1610 = vunpack.c.l.b16 %v1569
  %v1611 = vunpack.c.l.b16 %v1570
  %v1612 = vunpack.c.l.b16 %v1571
  %v1613 = vunpack.c.l.b16 %v1572
  %v1614 = vunpack.c.l.b16 %v1573
  %v1615 = vunpack.c.l.b16 %v1574
  %v1616 = vunpack.c.l.b16 %v1575
  %v1617 = vunpack.c.l.b16 %v1576
  %v1618 = vunpack.c.l.b16 %v1577
  %v1619 = vunpack.c.l.b16 %v1578
  %v1620 = vunpack.c.l.b16 %v1579
  %v1621 = vunpack.c.l.b16 %v1580
  %v1622 = vunpack.c.l.b16 %v1581
  %v1623 = vunpack.c.l.b16 %v1582
  %v1624 = vunpack.c.l.b16 %v1583
  %v1625 = vpack.c.b16 %v1610, %v1609
  %v1626 = vpack.c.b16 %v1612, %v1611
  %v1627 = vpack.c.b16 %v1614, %v1613
  %v1628 = vpack.c.b16 %v1616, %v1615
  %v1629 = vpack.c.b16 %v1618, %v1617
  %v1630 = vpack.c.b16 %v1620, %v1619
  %v1631 = vpack.c.b16 %v1622, %v1621
  %v1632 = vpack.c.b16 %v1624, %v1623
  %1641 = vmatprep.subr.bf16.mxu0 0
  %1642 = vmatpush1.bf16.msra.mxu0 %v1625
  %1643 = vmatprep.subr.bf16.mxu0 0
  %1644 = vmatpush1.bf16.msra.mxu0 %v1626
  %1645 = vmatprep.subr.bf16.mxu0 0
  %1646 = vmatpush1.bf16.msra.mxu0 %v1627
  %1647 = vmatprep.subr.bf16.mxu0 0
  %1648 = vmatpush1.bf16.msra.mxu0 %v1628
  %1649 = vmatprep.subr.bf16.mxu0 0
  %1650 = vmatpush1.bf16.msra.mxu0 %v1629
  %1651 = vmatprep.subr.bf16.mxu0 0
  %1652 = vmatpush1.bf16.msra.mxu0 %v1630
  %1653 = vmatprep.subr.bf16.mxu0 0
  %1654 = vmatpush1.bf16.msra.mxu0 %v1631
  %1655 = vmatprep.subr.bf16.mxu0 0
  %1656 = vmatpush1.bf16.msra.mxu0 %v1632
  %1657 = vmatprep.subr.bf16.mxu0 0
  %1658 = vmatpush1.bf16.msra.mxu0 0
  %1659 = vmatprep.subr.bf16.mxu0 0
  %1660 = vmatpush1.bf16.msra.mxu0 0
  %1661 = vmatprep.subr.bf16.mxu0 0
  %1662 = vmatpush1.bf16.msra.mxu0 0
  %1663 = vmatprep.subr.bf16.mxu0 0
  %1664 = vmatpush1.bf16.msra.mxu0 0
  %1665 = vmatprep.subr.bf16.mxu0 0
  %1666 = vmatpush1.bf16.msra.mxu0 0
  %1667 = vmatprep.subr.bf16.mxu0 0
  %1668 = vmatpush1.bf16.msra.mxu0 0
  %1669 = vmatprep.subr.bf16.mxu0 0
  %1670 = vmatpush1.bf16.msra.mxu0 0
  %1671 = vmatprep.subr.bf16.mxu0 0
  %1672 = vmatpush1.bf16.msra.mxu0 0
  %1673 = vmatprep.mubr.bf16.mxu0 0
  %1674 = vmatmul.mubr.bf16.gmra.mrb[0].mxu0 %v1584
  %v1675 = vpop.f32.mrb[0].mxu0
  %v1676 = vadd.f32 %v1591, %v1675
  %v1677 = vpop.f32.mrb[0].mxu0
  %v1678 = vpop.f32.mrb[0].mxu0
  %v1679 = vadd.f32 %v1591, %v1678
  %v1680 = vpop.f32.mrb[0].mxu0
  %1681 = vdwg.mxu0
  %v1682 = vadd.f32 %v1125, %v1676
  %v1683 = vadd.f32 %v1126, %v1679
  %s1684 = scalar_lea.vmem %s16, 1
  %v1685 = vld [vmem:[%s1684] sm:$0x1]
  %s1686 = scalar_lea.vmem %s17, 1
  %v1687 = vld [vmem:[%s1686] sm:$0x1]
  %v1688 = vsel %vm182, %v1682, 0.0
  %1689 = vadd.xlane.f32.xlu0 %v1688
  %v1690 = vpop.xlane.xlu0 %1689
  %v1691 = vsel %vm182, %v1683, 0.0
  %1692 = vadd.xlane.f32.xlu0 %v1691
  %v1693 = vpop.xlane.xlu0 %1692
  %v1694 = vmul.f32 %v1690, %v189
  %v1695 = vmul.f32 %v1693, %v189
  %v1696 = vmul.f32 %v1682, %v1682
  %v1697 = vmul.f32 %v1683, %v1683
  %v1698 = vsel %vm182, %v1696, 0.0
  %1699 = vadd.xlane.f32.xlu0 %v1698
  %v1700 = vpop.xlane.xlu0 %1699
  %v1701 = vsel %vm182, %v1697, 0.0
  %1702 = vadd.xlane.f32.xlu0 %v1701
  %v1703 = vpop.xlane.xlu0 %1702
  %v1704 = vmul.f32 %v1700, %v189
  %v1705 = vmul.f32 %v1703, %v189
  %v1706 = vmul.f32 %v1694, %v1694
  %v1707 = vmul.f32 %v1695, %v1695
  %v1708 = vsub.f32 %v1704, %v1706
  %v1709 = vsub.f32 %v1705, %v1707
  %v1710 = vsub.f32 %v1682, %v1694
  %v1711 = vsub.f32 %v1683, %v1695
  %v1712 = vadd.f32 %v1708, 1e-12
  %v1713 = vadd.f32 %v1709, 1e-12
  %v1714 = vrsqrt.pop %v1712
  %v1715 = vrsqrt.pop %v1713
  %v1716 = vmul.f32 %v1710, %v1714
  %v1717 = vmul.f32 %v1711, %v1715
  %v1719 = vlaneseq
  %v1720 = vshrl.u32 %v1719, 7
  %v1721 = vsub.s32 0, %v1720
  %v1722 = vrot.slane %v1685, %v1721
  %v1724 = vmul.f32 %v1716, %v1722
  %v1725 = vmul.f32 %v1717, %v1722
  %v1727 = vlaneseq
  %v1728 = vshrl.u32 %v1727, 7
  %v1729 = vsub.s32 0, %v1728
  %v1730 = vrot.slane %v1687, %v1729
  %v1732 = vadd.f32 %v1724, %v1730
  %v1733 = vadd.f32 %v1725, %v1730
  %s1734 = scalar_lea.vmem %s18, 16
  %v1735 = vld [vmem:[%s1734] sm:$0xf]
  %v1736 = vld [vmem:[%s1734 + $0x4] sm:$0xf]
  %v1737 = vld [vmem:[%s1734 + $0x8] sm:$0xf]
  %v1738 = vld [vmem:[%s1734 + $0xc] sm:$0xf]
  %v1739 = vpack.c.bf16 %v1733, %v1732
  %s1740 = scalar_lea.vmem %s19, 1
  %v1741 = vld [vmem:[%s1740] sm:$0x1]
  %v1743 = vlaneseq
  %v1744 = vshrl.u32 %v1743, 7
  %v1745 = vsub.s32 0, %v1744
  %v1746 = vrot.slane %v1741, %v1745
  %v1752 = vunpack.c.l.b16 %v1735
  %v1753 = vunpack.c.l.b16 %v1736
  %v1754 = vunpack.c.l.b16 %v1737
  %v1755 = vunpack.c.l.b16 %v1738
  %v1756 = vpack.c.b16 %v1753, %v1752
  %v1757 = vpack.c.b16 %v1755, %v1754
  %v1761 = vsel %vm182, %v1739, 0
  %1763 = vmatprep.subr.bf16.mxu0 0
  %1764 = vmatpush1.bf16.msra.mxu0 %v1756
  %1765 = vmatprep.subr.bf16.mxu0 0
  %1766 = vmatpush1.bf16.msra.mxu0 %v1757
  %1767 = vmatprep.subr.bf16.mxu0 0
  %1768 = vmatpush1.bf16.msra.mxu0 0
  %1769 = vmatprep.subr.bf16.mxu0 0
  %1770 = vmatpush1.bf16.msra.mxu0 0
  %1771 = vmatprep.subr.bf16.mxu0 0
  %1772 = vmatpush1.bf16.msra.mxu0 0
  %1773 = vmatprep.subr.bf16.mxu0 0
  %1774 = vmatpush1.bf16.msra.mxu0 0
  %1775 = vmatprep.subr.bf16.mxu0 0
  %1776 = vmatpush1.bf16.msra.mxu0 0
  %1777 = vmatprep.subr.bf16.mxu0 0
  %1778 = vmatpush1.bf16.msra.mxu0 0
  %1779 = vmatprep.subr.bf16.mxu0 0
  %1780 = vmatpush1.bf16.msra.mxu0 0
  %1781 = vmatprep.subr.bf16.mxu0 0
  %1782 = vmatpush1.bf16.msra.mxu0 0
  %1783 = vmatprep.subr.bf16.mxu0 0
  %1784 = vmatpush1.bf16.msra.mxu0 0
  %1785 = vmatprep.subr.bf16.mxu0 0
  %1786 = vmatpush1.bf16.msra.mxu0 0
  %1787 = vmatprep.subr.bf16.mxu0 0
  %1788 = vmatpush1.bf16.msra.mxu0 0
  %1789 = vmatprep.subr.bf16.mxu0 0
  %1790 = vmatpush1.bf16.msra.mxu0 0
  %1791 = vmatprep.subr.bf16.mxu0 0
  %1792 = vmatpush1.bf16.msra.mxu0 0
  %1793 = vmatprep.subr.bf16.mxu0 0
  %1794 = vmatpush1.bf16.msra.mxu0 0
  %1795 = vmatprep.mubr.bf16.mxu0 0
  %1796 = vmatmul.mubr.bf16.gmra.mrb[0].mxu0 %v1761
  %v1797 = vpop.f32.mrb[0].mxu0
  %v1798 = vadd.f32 %v1746, %v1797
  %v1799 = vpop.f32.mrb[0].mxu0
  %v1800 = vpop.f32.mrb[0].mxu0
  %v1801 = vadd.f32 %v1746, %v1800
  %v1802 = vpop.f32.mrb[0].mxu0
  %1803 = vdwg.mxu0
  %v1804 = vmul.f32 %v1798, 0.5
  %v1805 = vmul.f32 %v1801, 0.5
  %v1806 = vmul.f32 %v1798, 0.044715
  %v1807 = vmul.f32 %v1801, 0.044715
  %v1808 = vmul.f32 %v1806, %v1798
  %v1809 = vmul.f32 %v1807, %v1801
  %v1810 = vmul.f32 %v1808, %v1798
  %v1811 = vmul.f32 %v1809, %v1801
  %v1812 = vadd.f32 %v1798, %v1810
  %v1813 = vadd.f32 %v1801, %v1811
  %v1814 = vmul.f32 %v1812, 0.7978846
  %v1815 = vmul.f32 %v1813, 0.7978846
  %v1816 = vtanh.pop %v1814
  %v1817 = vtanh.pop %v1815
  %v1818 = vadd.f32 %v1816, 1.0
  %v1819 = vadd.f32 %v1817, 1.0
  %v1820 = vmul.f32 %v1804, %v1818
  %v1821 = vmul.f32 %v1805, %v1819
  %s1822 = scalar_lea.vmem %s20, 32
  %v1823 = vld [vmem:[%s1822] sm:$0xf]
  %v1824 = vld [vmem:[%s1822 + $0x4] sm:$0xf]
  %v1825 = vld [vmem:[%s1822 + $0x8] sm:$0xf]
  %v1826 = vld [vmem:[%s1822 + $0xc] sm:$0xf]
  %v1827 = vld [vmem:[%s1822 + $0x10] sm:$0xf]
  %v1828 = vld [vmem:[%s1822 + $0x14] sm:$0xf]
  %v1829 = vld [vmem:[%s1822 + $0x18] sm:$0xf]
  %v1830 = vld [vmem:[%s1822 + $0x1c] sm:$0xf]
  %v1831 = vpack.c.bf16 %v1821, %v1820
  %s1832 = scalar_lea.vmem %s21, 1
  %v1833 = vld [vmem:[%s1832] sm:$0x1]
  %v1835 = vlaneseq
  %v1836 = vshrl.u32 %v1835, 7
  %v1837 = vsub.s32 0, %v1836
  %v1838 = vrot.slane %v1833, %v1837
  %v1848 = vunpack.c.l.b16 %v1823
  %v1849 = vunpack.c.l.b16 %v1824
  %v1850 = vunpack.c.l.b16 %v1825
  %v1851 = vunpack.c.l.b16 %v1826
  %v1852 = vunpack.c.l.b16 %v1827
  %v1853 = vunpack.c.l.b16 %v1828
  %v1854 = vunpack.c.l.b16 %v1829
  %v1855 = vunpack.c.l.b16 %v1830
  %v1856 = vpack.c.b16 %v1849, %v1848
  %v1857 = vpack.c.b16 %v1851, %v1850
  %v1858 = vpack.c.b16 %v1853, %v1852
  %v1859 = vpack.c.b16 %v1855, %v1854
  %v1865 = vsel %vm699, %v1831, 0
  %1867 = vmatprep.subr.bf16.mxu0 0
  %1868 = vmatpush1.bf16.msra.mxu0 %v1856
  %1869 = vmatprep.subr.bf16.mxu0 0
  %1870 = vmatpush1.bf16.msra.mxu0 %v1857
  %1871 = vmatprep.subr.bf16.mxu0 0
  %1872 = vmatpush1.bf16.msra.mxu0 %v1858
  %1873 = vmatprep.subr.bf16.mxu0 0
  %1874 = vmatpush1.bf16.msra.mxu0 %v1859
  %1875 = vmatprep.subr.bf16.mxu0 0
  %1876 = vmatpush1.bf16.msra.mxu0 0
  %1877 = vmatprep.subr.bf16.mxu0 0
  %1878 = vmatpush1.bf16.msra.mxu0 0
  %1879 = vmatprep.subr.bf16.mxu0 0
  %1880 = vmatpush1.bf16.msra.mxu0 0
  %1881 = vmatprep.subr.bf16.mxu0 0
  %1882 = vmatpush1.bf16.msra.mxu0 0
  %1883 = vmatprep.subr.bf16.mxu0 0
  %1884 = vmatpush1.bf16.msra.mxu0 0
  %1885 = vmatprep.subr.bf16.mxu0 0
  %1886 = vmatpush1.bf16.msra.mxu0 0
  %1887 = vmatprep.subr.bf16.mxu0 0
  %1888 = vmatpush1.bf16.msra.mxu0 0
  %1889 = vmatprep.subr.bf16.mxu0 0
  %1890 = vmatpush1.bf16.msra.mxu0 0
  %1891 = vmatprep.subr.bf16.mxu0 0
  %1892 = vmatpush1.bf16.msra.mxu0 0
  %1893 = vmatprep.subr.bf16.mxu0 0
  %1894 = vmatpush1.bf16.msra.mxu0 0
  %1895 = vmatprep.subr.bf16.mxu0 0
  %1896 = vmatpush1.bf16.msra.mxu0 0
  %1897 = vmatprep.subr.bf16.mxu0 0
  %1898 = vmatpush1.bf16.msra.mxu0 0
  %1899 = vmatprep.mubr.bf16.mxu0 0
  %1900 = vmatmul.mubr.bf16.gmra.mrb[0].mxu0 %v1865
  %v1901 = vpop.f32.mrb[0].mxu0
  %v1902 = vadd.f32 %v1838, %v1901
  %v1903 = vpop.f32.mrb[0].mxu0
  %v1904 = vpop.f32.mrb[0].mxu0
  %v1905 = vadd.f32 %v1838, %v1904
  %v1906 = vpop.f32.mrb[0].mxu0
  %1907 = vdwg.mxu0
  %v1908 = vadd.f32 %v1732, %v1902
  %v1909 = vadd.f32 %v1733, %v1905
  %s1910 = scalar_lea.vmem %s22, 1
  %v1911 = vld [vmem:[%s1910] sm:$0x1]
  %s1912 = scalar_lea.vmem %s23, 1
  %v1913 = vld [vmem:[%s1912] sm:$0x1]
  %v1914 = vsel %vm182, %v1908, 0.0
  %1915 = vadd.xlane.f32.xlu0 %v1914
  %v1916 = vpop.xlane.xlu0 %1915
  %v1917 = vsel %vm182, %v1909, 0.0
  %1918 = vadd.xlane.f32.xlu0 %v1917
  %v1919 = vpop.xlane.xlu0 %1918
  %v1920 = vmul.f32 %v1916, %v189
  %v1921 = vmul.f32 %v1919, %v189
  %v1922 = vmul.f32 %v1908, %v1908
  %v1923 = vmul.f32 %v1909, %v1909
  %v1924 = vsel %vm182, %v1922, 0.0
  %1925 = vadd.xlane.f32.xlu0 %v1924
  %v1926 = vpop.xlane.xlu0 %1925
  %v1927 = vsel %vm182, %v1923, 0.0
  %1928 = vadd.xlane.f32.xlu0 %v1927
  %v1929 = vpop.xlane.xlu0 %1928
  %v1930 = vmul.f32 %v1926, %v189
  %v1931 = vmul.f32 %v1929, %v189
  %v1932 = vmul.f32 %v1920, %v1920
  %v1933 = vmul.f32 %v1921, %v1921
  %v1934 = vsub.f32 %v1930, %v1932
  %v1935 = vsub.f32 %v1931, %v1933
  %v1936 = vsub.f32 %v1908, %v1920
  %v1937 = vsub.f32 %v1909, %v1921
  %v1938 = vadd.f32 %v1934, 1e-12
  %v1939 = vadd.f32 %v1935, 1e-12
  %v1940 = vrsqrt.pop %v1938
  %v1941 = vrsqrt.pop %v1939
  %v1942 = vmul.f32 %v1936, %v1940
  %v1943 = vmul.f32 %v1937, %v1941
  %v1945 = vlaneseq
  %v1946 = vshrl.u32 %v1945, 7
  %v1947 = vsub.s32 0, %v1946
  %v1948 = vrot.slane %v1911, %v1947
  %v1950 = vmul.f32 %v1942, %v1948
  %v1951 = vmul.f32 %v1943, %v1948
  %v1953 = vlaneseq
  %v1954 = vshrl.u32 %v1953, 7
  %v1955 = vsub.s32 0, %v1954
  %v1956 = vrot.slane %v1913, %v1955
  %v1958 = vadd.f32 %v1950, %v1956
  %v1959 = vadd.f32 %v1951, %v1956
  %v1960 = vld [vmem:[%s11] sm:$0xf]
  %v1961 = vpack.c.bf16 %v1959, %v1958
  %v1963 = vsel %vm353, %v1960, 0
  %1965 = vmatprep.subr.bf16.mxu0 0
  %1966 = vmatpush1.bf16.msra.mxu0 %v1961
  %1967 = vmatprep.subr.bf16.mxu0 0
  %1968 = vmatpush1.bf16.msra.mxu0 0
  %1969 = vmatprep.subr.bf16.mxu0 0
  %1970 = vmatpush1.bf16.msra.mxu0 0
  %1971 = vmatprep.subr.bf16.mxu0 0
  %1972 = vmatpush1.bf16.msra.mxu0 0
  %1973 = vmatprep.subr.bf16.mxu0 0
  %1974 = vmatpush1.bf16.msra.mxu0 0
  %1975 = vmatprep.subr.bf16.mxu0 0
  %1976 = vmatpush1.bf16.msra.mxu0 0
  %1977 = vmatprep.subr.bf16.mxu0 0
  %1978 = vmatpush1.bf16.msra.mxu0 0
  %1979 = vmatprep.subr.bf16.mxu0 0
  %1980 = vmatpush1.bf16.msra.mxu0 0
  %1981 = vmatprep.subr.bf16.mxu0 0
  %1982 = vmatpush1.bf16.msra.mxu0 0
  %1983 = vmatprep.subr.bf16.mxu0 0
  %1984 = vmatpush1.bf16.msra.mxu0 0
  %1985 = vmatprep.subr.bf16.mxu0 0
  %1986 = vmatpush1.bf16.msra.mxu0 0
  %1987 = vmatprep.subr.bf16.mxu0 0
  %1988 = vmatpush1.bf16.msra.mxu0 0
  %1989 = vmatprep.subr.bf16.mxu0 0
  %1990 = vmatpush1.bf16.msra.mxu0 0
  %1991 = vmatprep.subr.bf16.mxu0 0
  %1992 = vmatpush1.bf16.msra.mxu0 0
  %1993 = vmatprep.subr.bf16.mxu0 0
  %1994 = vmatpush1.bf16.msra.mxu0 0
  %1995 = vmatprep.subr.bf16.mxu0 0
  %1996 = vmatpush1.bf16.msra.mxu0 0
  %1997 = vmatprep.mubr.bf16.mxu0 0
  %1998 = vmatmul.mubr.bf16.gmra.mrb[0].mxu0 %v1963
  %v1999 = vpop.f32.mrb[0].mxu0
  %v2000 = vadd.f32 0.0, %v1999
  %v2001 = vpop.f32.mrb[0].mxu0
  %v2002 = vpop.f32.mrb[0].mxu0
  %v2003 = vpop.f32.mrb[0].mxu0
  %2004 = vdwg.mxu0
  %v2005 = vld [vmem:[%s24] sm:$0xf]
  %v2006 = vld [vmem:[%s24 + $0x4] sm:$0xf]
  %v2007 = vld [vmem:[%s24 + $0x8] sm:$0xf]
  %v2008 = vld [vmem:[%s24 + $0xc] sm:$0xf]
  %v2009 = vpack.c.bf16 %v2000, %v2000
  %v2010 = vld [vmem:[%s25] sm:$0x1]
  %v2012 = vlaneseq
  %v2013 = vshrl.u32 %v2012, 7
  %v2014 = vsub.s32 0, %v2013
  %v2015 = vrot.slane %v2010, %v2014
  %v2021 = vunpack.c.l.b16 %v2005
  %v2022 = vunpack.c.l.b16 %v2006
  %v2023 = vunpack.c.l.b16 %v2007
  %v2024 = vunpack.c.l.b16 %v2008
  %v2025 = vpack.c.b16 %v2022, %v2021
  %v2026 = vpack.c.b16 %v2024, %v2023
  %v2030 = vsel %vm182, %v2009, 0
  %2032 = vmatprep.subr.bf16.mxu0 0
  %2033 = vmatpush1.bf16.msra.mxu0 %v2025
  %2034 = vmatprep.subr.bf16.mxu0 0
  %2035 = vmatpush1.bf16.msra.mxu0 %v2026
  %2036 = vmatprep.subr.bf16.mxu0 0
  %2037 = vmatpush1.bf16.msra.mxu0 0
  %2038 = vmatprep.subr.bf16.mxu0 0
  %2039 = vmatpush1.bf16.msra.mxu0 0
  %2040 = vmatprep.subr.bf16.mxu0 0
  %2041 = vmatpush1.bf16.msra.mxu0 0
  %2042 = vmatprep.subr.bf16.mxu0 0
  %2043 = vmatpush1.bf16.msra.mxu0 0
  %2044 = vmatprep.subr.bf16.mxu0 0
  %2045 = vmatpush1.bf16.msra.mxu0 0
  %2046 = vmatprep.subr.bf16.mxu0 0
  %2047 = vmatpush1.bf16.msra.mxu0 0
  %2048 = vmatprep.subr.bf16.mxu0 0
  %2049 = vmatpush1.bf16.msra.mxu0 0
  %2050 = vmatprep.subr.bf16.mxu0 0
  %2051 = vmatpush1.bf16.msra.mxu0 0
  %2052 = vmatprep.subr.bf16.mxu0 0
  %2053 = vmatpush1.bf16.msra.mxu0 0
  %2054 = vmatprep.subr.bf16.mxu0 0
  %2055 = vmatpush1.bf16.msra.mxu0 0
  %2056 = vmatprep.subr.bf16.mxu0 0
  %2057 = vmatpush1.bf16.msra.mxu0 0
  %2058 = vmatprep.subr.bf16.mxu0 0
  %2059 = vmatpush1.bf16.msra.mxu0 0
  %2060 = vmatprep.subr.bf16.mxu0 0
  %2061 = vmatpush1.bf16.msra.mxu0 0
  %2062 = vmatprep.subr.bf16.mxu0 0
  %2063 = vmatpush1.bf16.msra.mxu0 0
  %2064 = vmatprep.mubr.bf16.mxu0 0
  %2065 = vmatmul.mubr.bf16.gmra.mrb[0].mxu0 %v2030
  %v2066 = vpop.f32.mrb[0].mxu0
  %v2067 = vadd.f32 %v2015, %v2066
  %v2068 = vpop.f32.mrb[0].mxu0
  %v2069 = vpop.f32.mrb[0].mxu0
  %v2070 = vpop.f32.mrb[0].mxu0
  %2071 = vdwg.mxu0
  %v2072 = vlaneseq
  %v2073 = vshrl.u32 %v2072, 7
  %vm2074 = vcmp.lt.s32.totalorder %v85, 13
  %v2075 = vsel %vm2074, %v2067, -1e+30
  %2076 = vmax.xlane.f32.xlu0 %v2075
  %v2077 = vpop.xlane.xlu0 %2076
  %v2078 = vsub.f32 %v2075, %v2077
  %v2079 = vmul.f32 %v2078, 1.442695
  %v2080 = vpow.pop %v2079
  %2081 = vadd.xlane.f32.xlu0 %v2080
  %v2082 = vpop.xlane.xlu0 %2081
  %v2083 = vlog2.pop %v2082
  %v2084 = vmul.f32 %v2083, 0.6931472
  %v2085 = vadd.f32 %v2077, %v2084
  %v2086 = vld [vmem:[%s1] sm:$0xff]
  %2087 = vset.pattern.permute.xlu0 0
  %2088 = vperm.xlu0 %2087, %v2086
  %v2089 = vpop.permute.xlu0 %2088
  %vm2090 = vcmp.eq.s32.totalorder %v85, %v2089
  %v2091 = vsel %vm2090, %v2067, 0.0
  %2092 = vadd.xlane.f32.xlu0 %v2091
  %v2093 = vpop.xlane.xlu0 %2092
  %vm2094 = vcmp.lt.s32.totalorder %v2073, 2
  %v2095 = vsub.f32 %v2085, %v2093
  %v2096 = vsel %vm2094, %v2095, 0.0
  %v2097 = vrot.slane %v2096, 4
  %v2098 = vadd.f32 %v2096, %v2097
  %v2099 = vrot.slane %v2098, 2
  %v2100 = vadd.f32 %v2098, %v2099
  %v2101 = vrot.slane %v2100, 1
  %v2102 = vadd.f32 %v2100, %v2101
  %v2103 = vmul.f32 %v2102, 0.5
  %vm2104 = vcmp.eq.s32.totalorder %v2073, 7
  %v2105 = vsel %vm2104, %v2103, %v2067
  %2106 = vst [vmem:[%s26] sm:$0xff] %v2105
  // Predicated region
  $region106: #{bert_edarc_erc_forward.1} parent=0 // pred_check
    _
  $region107: #{bert_edarc_erc_forward.1} parent=0 // pred_check_branch
    %2108 = sbr.rel (0) target = $region109
  $region108: #{bert_edarc_erc_forward.1} parent=0 // pred_region
    _
  $region109: #{bert_edarc_erc_forward.1} parent=0 // pred_fallthru
    _
  // Predicated region
  $region110: #{bert_edarc_erc_forward.1} parent=0 // pred_check
    _
  $region111: #{bert_edarc_erc_forward.1} parent=0 // pred_check_branch
    %2110 = sbr.rel (0) target = $region113
  $region112: #{bert_edarc_erc_forward.1} parent=0 // pred_region
    _
  $region113: #{bert_edarc_erc_forward.1} parent=0 // pred_fallthru
    _

</llo_original>
